<compile_context>
chip_gen: v7x
topology: tpu7x:2x2x1
jax: 0.10.0
libtpu: 0.0.40
codegen_flags: <defaults>
</compile_context>

<pallas_src>
import functools

import jax
import jax.numpy as jnp
from jax.experimental import pallas as pl
from jax.experimental.pallas import tpu as pltpu  # noqa: F401  (TPU backend assumed)


LANES = 128


def _full_spec(shape):
    nd = len(shape)
    return pl.BlockSpec(shape, lambda *_: (0,) * nd)


# ----------------------------------------------------------------------------
# Fused Pallas kernel: clip_alignment + encoder + CVAE decode (+cumsum+offset)
# ----------------------------------------------------------------------------

def _fused_kpst_kernel(x_ref, text_ref, q_ref, onehot_ref, z_ref, qrep_ref,
                       cw1_ref, cb1_ref, cw2_ref, cb2_ref, cbs_ref, cbh_ref,
                       ew1_ref, eb1_ref, ew2_ref, eb2_ref,
                       dwcq_ref, dwct_ref, dwcf_ref, db1_ref, dwz_ref,
                       dw2_ref, db2_ref,
                       o_ref):
    f32 = jnp.float32

    # --- clip_alignment: Linear(512->128) -> ReLU -> Linear(128->32) -> BN (eval) ---
    # bf16 weights / inputs on the MXU, f32 accumulation, f32 epilogue.
    t = jnp.dot(text_ref[...].astype(jnp.bfloat16), cw1_ref[...],
                preferred_element_type=f32) + cb1_ref[...]
    t = jnp.maximum(t, 0.0)
    ft_text = (jnp.dot(t, cw2_ref[...], preferred_element_type=f32)
               + cb2_ref[...]) * cbs_ref[...] + cbh_ref[...]              # (B, AW)

    # --- encoder stand-in: point-wise 2-layer MLP on [pos | feat] rows ---
    # TODO(synk): real encoder comes from build_model_from_cfg(encoder_args).
    h = jnp.maximum(jnp.dot(x_ref[...], ew1_ref[...], preferred_element_type=f32)
                    + eb1_ref[...], 0.0)
    f = jnp.dot(h, ew2_ref[...], preferred_element_type=f32) + eb2_ref[...]  # (B*M, C)
    n_pts = x_ref.shape[0] - q_ref.shape[0]
    ft_query = f[n_pts:, :]          # query rows were placed last by the wrapper (R, C)

    # --- CVAE condition: concat([query, ft_text_per_row, ft_query]) @ Wc + b1,
    #     written as split matmuls (identical result, no in-kernel lane concat).
    #     Sample-invariant -> computed once (hoisted out of the old S loop).
    tproj = jnp.dot(ft_text, dwct_ref[...], preferred_element_type=f32)      # (B, H)
    base = (jnp.dot(q_ref[...], dwcq_ref[...], preferred_element_type=f32)
            + jnp.dot(onehot_ref[...], tproj, preferred_element_type=f32)    # per-batch bcast
            + jnp.dot(ft_query, dwcf_ref[...], preferred_element_type=f32)
            + db1_ref[...])                                                  # (R, H)

    # --- CVAE decoder, all samples flattened into rows (S*R, ·) ---
    # TODO(synk): cvae is built from cvae_args externally; stand-in decoder is
    # relu(ctx@Wc + z@Wz + b1) @ W2 + b2; cumsum + query offset are folded into
    # dw2_ref / db2_ref / qrep_ref at trace time (lane-padded to 128 wide).
    n_samples = z_ref.shape[0] // q_ref.shape[0]
    base_rep = jnp.concatenate([base] * n_samples, axis=0)                   # (S*R, H)
    hz = jnp.maximum(base_rep + jnp.dot(z_ref[...], dwz_ref[...],
                                        preferred_element_type=f32), 0.0)
    o_ref[...] = (jnp.dot(hz, dw2_ref[...], preferred_element_type=f32)
                  + db2_ref[...] + qrep_ref[...])                            # (S*R, 128)


# ----------------------------------------------------------------------------
# JAX wrapper mirroring BaseKPST.get_context / BaseKPST.inference (clip_fusion='late')
# ----------------------------------------------------------------------------

@functools.partial(jax.jit, static_argnames=("num_sample", "traj_steps", "latent_dim"))
def kpst_inference(pos, feat, text_feat, query, params, z_key,
                   num_sample=3, traj_steps=4, latent_dim=16):
    n_b, n_q = query.shape[0], query.shape[1]
    n_pt = pos.shape[1]
    query = query.reshape(n_b, n_q, -1)
    R = n_b * n_q
    S = num_sample
    T = traj_steps
    d_out = 3 * T

    # Encoder input rows.  Original layout is per-batch [N point rows | n_q query rows];
    # the stand-in encoder is point-wise, so we reorder to [all point rows | all query
    # rows] (identical results for the query rows, which are the only ones used).
    qe = jnp.broadcast_to(params["query_embedding"], (n_b, n_q, 6))
    pt_rows = jnp.concatenate([pos, feat], axis=-1).reshape(n_b * n_pt, 9)
    q_rows_enc = jnp.concatenate([query, qe], axis=-1).reshape(R, 9)
    x_rows = jnp.concatenate([pt_rows, q_rows_enc], axis=0)              # (B*(N+n_q), 9)

    q_rows = query.reshape(R, 3)
    onehot = jnp.repeat(jnp.eye(n_b, dtype=jnp.float32), n_q, axis=0)    # (R, B) batch map

    z = jax.random.normal(z_key, (S, R, latent_dim), jnp.float32)
    z_flat = z.reshape(S * R, latent_dim)

    # torch.cumsum(pred, dim=-2) == pred_flat @ kron(triu(ones(T,T)), I3); fold it
    # (and the trailing +query offset) into the decoder output weight/bias, and
    # zero-pad the last axis to 128 lanes so the kernel's store is lane-dense.
    cum_mat = jnp.kron(jnp.triu(jnp.ones((T, T), jnp.float32)),
                       jnp.eye(3, dtype=jnp.float32))                    # (T*3, T*3)
    pad = lambda a: jnp.pad(a, ((0, 0), (0, LANES - a.shape[-1])))
    dw2c_p = pad(params["dec_w2"] @ cum_mat)                             # (H, 128)
    db2c_p = pad(params["dec_b2"] @ cum_mat)                             # (1, 128)
    q_rep_p = pad(jnp.tile(jnp.tile(q_rows, (1, T)), (S, 1)))            # (S*R, 128)

    # Split dec_wc by the 'late' condition layout [query(3) | ft_text(AW) | ft_query(C)].
    aw = params["clip_w2"].shape[1]
    dwc = params["dec_wc"]
    dwc_q, dwc_t, dwc_f = dwc[:3], dwc[3:3 + aw], dwc[3 + aw:]

    args = (x_rows, text_feat, q_rows, onehot, z_flat, q_rep_p,
            params["clip_w1"], params["clip_b1"], params["clip_w2"], params["clip_b2"],
            params["clip_bn_scale"], params["clip_bn_shift"],
            params["enc_w1"], params["enc_b1"], params["enc_w2"], params["enc_b2"],
            dwc_q, dwc_t, dwc_f, params["dec_b1"], params["dec_wz"],
            dw2c_p, db2c_p)

    out = pl.pallas_call(
        _fused_kpst_kernel,
        out_shape=jax.ShapeDtypeStruct((S * R, LANES), jnp.float32),
        in_specs=[_full_spec(a.shape) for a in args],
        out_specs=_full_spec((S * R, LANES)),
    )(*args)

    traj = out[:, :d_out].reshape(S, n_b, n_q, T, 3)
    # torch.stack(sample_traj, dim=2) -> (B, n_q, S, T, 3)
    return jnp.transpose(traj, (1, 2, 0, 3, 4))


# ----------------------------------------------------------------------------
# deterministic parameter init (shapes follow BaseKPST.__init__)
# ----------------------------------------------------------------------------

def init_params(key):
    ks = jax.random.split(key, 18)
    s = 0.05
    p = {
        "query_embedding": jax.random.normal(ks[0], (1, 1, 6), jnp.float32),
        # clip_alignment: [512] + hidden_dim [128] + [aligned_width 32], BN(32)
        "clip_w1": (jax.random.normal(ks[1], (512, 128), jnp.float32) * s).astype(jnp.bfloat16),
        "clip_b1": jax.random.normal(ks[2], (1, 128), jnp.float32) * s,
        "clip_w2": jax.random.normal(ks[3], (128, 32), jnp.float32) * s,
        "clip_b2": jax.random.normal(ks[4], (1, 32), jnp.float32) * s,
        # encoder stand-in: in = 3(pos) + 6(feat) -> 64 -> 64
        "enc_w1": jax.random.normal(ks[5], (9, 64), jnp.float32) * s,
        "enc_b1": jax.random.normal(ks[6], (1, 64), jnp.float32) * s,
        "enc_w2": jax.random.normal(ks[7], (64, 64), jnp.float32) * s,
        "enc_b2": jax.random.normal(ks[8], (1, 64), jnp.float32) * s,
        # cvae decoder stand-in: condition_dim = 64 + 32 + 3 = 99 ; latent 16 ; out T*3=12
        "dec_wc": jax.random.normal(ks[9], (99, 64), jnp.float32) * s,
        "dec_wz": jax.random.normal(ks[10], (16, 64), jnp.float32) * s,
        "dec_b1": jax.random.normal(ks[11], (1, 64), jnp.float32) * s,
        "dec_w2": jax.random.normal(ks[12], (64, 12), jnp.float32) * s,
        "dec_b2": jax.random.normal(ks[13], (1, 12), jnp.float32) * s,
    }
    # BatchNorm1d(32) in eval mode -> fused scale/shift
    gamma = 1.0 + 0.1 * jax.random.normal(ks[14], (1, 32), jnp.float32)
    beta = 0.1 * jax.random.normal(ks[15], (1, 32), jnp.float32)
    rmean = 0.1 * jax.random.normal(ks[16], (1, 32), jnp.float32)
    rvar = 1.0 + 0.1 * jnp.abs(jax.random.normal(ks[17], (1, 32), jnp.float32))
    scale = gamma * jax.lax.rsqrt(rvar + 1e-5)
    p["clip_bn_scale"] = scale
    p["clip_bn_shift"] = beta - rmean * scale
    return p


if __name__ == "__main__":
    B, N, n_q = 2, 16, 8
    num_sample, traj_steps, latent_dim = 3, 4, 16

    key = jax.random.PRNGKey(0)
    k_param, k_pos, k_feat, k_text, k_query, k_z = jax.random.split(key, 6)

    params = init_params(k_param)
    pos = jax.random.normal(k_pos, (B, N, 3), jnp.float32)
    feat = jax.random.normal(k_feat, (B, N, 6), jnp.float32)
    text_feat = jax.random.normal(k_text, (B, 512), jnp.float32)
    query = jax.random.normal(k_query, (B, n_q, 3), jnp.float32)

    out = kpst_inference(pos, feat, text_feat, query, params, k_z,
                         num_sample=num_sample, traj_steps=traj_steps,
                         latent_dim=latent_dim)
    out = jax.block_until_ready(out)
    assert out.shape == (B, n_q, num_sample, traj_steps, 3), out.shape
    assert bool(jnp.all(jnp.isfinite(out)))
    print("KERNEL_OK")
</pallas_src>

<mosaic_0001>
module attributes {stable_mosaic.version = 11 : i64} {
  func.func @_fused_kpst_kernel(%arg0: memref<48x9xf32, #tpu.memory_space<vmem>>, %arg1: memref<2x512xf32, #tpu.memory_space<vmem>>, %arg2: memref<16x3xf32, #tpu.memory_space<vmem>>, %arg3: memref<16x2xf32, #tpu.memory_space<vmem>>, %arg4: memref<48x16xf32, #tpu.memory_space<vmem>>, %arg5: memref<48x128xf32, #tpu.memory_space<vmem>>, %arg6: memref<512x128xbf16, #tpu.memory_space<vmem>>, %arg7: memref<1x128xf32, #tpu.memory_space<vmem>>, %arg8: memref<128x32xf32, #tpu.memory_space<vmem>>, %arg9: memref<1x32xf32, #tpu.memory_space<vmem>>, %arg10: memref<1x32xf32, #tpu.memory_space<vmem>>, %arg11: memref<1x32xf32, #tpu.memory_space<vmem>>, %arg12: memref<9x64xf32, #tpu.memory_space<vmem>>, %arg13: memref<1x64xf32, #tpu.memory_space<vmem>>, %arg14: memref<64x64xf32, #tpu.memory_space<vmem>>, %arg15: memref<1x64xf32, #tpu.memory_space<vmem>>, %arg16: memref<3x64xf32, #tpu.memory_space<vmem>>, %arg17: memref<32x64xf32, #tpu.memory_space<vmem>>, %arg18: memref<64x64xf32, #tpu.memory_space<vmem>>, %arg19: memref<1x64xf32, #tpu.memory_space<vmem>>, %arg20: memref<16x64xf32, #tpu.memory_space<vmem>>, %arg21: memref<64x128xf32, #tpu.memory_space<vmem>>, %arg22: memref<1x128xf32, #tpu.memory_space<vmem>>, %arg23: memref<48x128xf32, #tpu.memory_space<vmem>>) attributes {dimension_semantics = [], scalar_prefetch = 0 : i64, scratch_operands = 0 : i64, tpu.core_type = #tpu.core_type<tc>} {
    %c0 = arith.constant 0 : index
    %c0_0 = arith.constant 0 : index
    %0 = vector.load %arg1[%c0, %c0_0] : memref<2x512xf32, #tpu.memory_space<vmem>>, vector<2x512xf32>
    %1 = arith.truncf %0 : vector<2x512xf32> to vector<2x512xbf16>
    %c0_1 = arith.constant 0 : index
    %c0_2 = arith.constant 0 : index
    %2 = vector.load %arg6[%c0_1, %c0_2] : memref<512x128xbf16, #tpu.memory_space<vmem>>, vector<512x128xbf16>
    %cst = arith.constant dense<0.000000e+00> : vector<2x128xf32>
    %3 = tpu.matmul %1, %2, %cst {dimension_numbers = #tpu.dot_dimension_numbers<[1], [0], [0], [1], [0, 0, 1, 1], [], []>} : vector<2x512xbf16>, vector<512x128xbf16>, vector<2x128xf32> -> vector<2x128xf32>
    %c0_3 = arith.constant 0 : index
    %c0_4 = arith.constant 0 : index
    %4 = vector.load %arg7[%c0_3, %c0_4] : memref<1x128xf32, #tpu.memory_space<vmem>>, vector<1x128xf32>
    %5 = vector.broadcast %4 : vector<1x128xf32> to vector<2x128xf32>
    %6 = arith.addf %3, %5 : vector<2x128xf32>
    %cst_5 = arith.constant 0.000000e+00 : f32
    %7 = vector.broadcast %cst_5 : f32 to vector<2x128xf32>
    %8 = arith.maximumf %6, %7 : vector<2x128xf32>
    %c0_6 = arith.constant 0 : index
    %c0_7 = arith.constant 0 : index
    %9 = vector.load %arg8[%c0_6, %c0_7] : memref<128x32xf32, #tpu.memory_space<vmem>>, vector<128x32xf32>
    %cst_8 = arith.constant dense<0.000000e+00> : vector<2x32xf32>
    %10 = tpu.matmul %8, %9, %cst_8 {dimension_numbers = #tpu.dot_dimension_numbers<[1], [0], [0], [1], [0, 0, 1, 1], [], []>} : vector<2x128xf32>, vector<128x32xf32>, vector<2x32xf32> -> vector<2x32xf32>
    %c0_9 = arith.constant 0 : index
    %c0_10 = arith.constant 0 : index
    %11 = vector.load %arg9[%c0_9, %c0_10] : memref<1x32xf32, #tpu.memory_space<vmem>>, vector<1x32xf32>
    %12 = vector.broadcast %11 : vector<1x32xf32> to vector<2x32xf32>
    %13 = arith.addf %10, %12 : vector<2x32xf32>
    %c0_11 = arith.constant 0 : index
    %c0_12 = arith.constant 0 : index
    %14 = vector.load %arg10[%c0_11, %c0_12] : memref<1x32xf32, #tpu.memory_space<vmem>>, vector<1x32xf32>
    %15 = vector.broadcast %14 : vector<1x32xf32> to vector<2x32xf32>
    %16 = arith.mulf %13, %15 : vector<2x32xf32>
    %c0_13 = arith.constant 0 : index
    %c0_14 = arith.constant 0 : index
    %17 = vector.load %arg11[%c0_13, %c0_14] : memref<1x32xf32, #tpu.memory_space<vmem>>, vector<1x32xf32>
    %18 = vector.broadcast %17 : vector<1x32xf32> to vector<2x32xf32>
    %19 = arith.addf %16, %18 : vector<2x32xf32>
    %c0_15 = arith.constant 0 : index
    %c0_16 = arith.constant 0 : index
    %20 = vector.load %arg0[%c0_15, %c0_16] : memref<48x9xf32, #tpu.memory_space<vmem>>, vector<48x9xf32>
    %c0_17 = arith.constant 0 : index
    %c0_18 = arith.constant 0 : index
    %21 = vector.load %arg12[%c0_17, %c0_18] : memref<9x64xf32, #tpu.memory_space<vmem>>, vector<9x64xf32>
    %cst_19 = arith.constant dense<0.000000e+00> : vector<48x64xf32>
    %22 = tpu.matmul %20, %21, %cst_19 {dimension_numbers = #tpu.dot_dimension_numbers<[1], [0], [0], [1], [0, 0, 1, 1], [], []>} : vector<48x9xf32>, vector<9x64xf32>, vector<48x64xf32> -> vector<48x64xf32>
    %c0_20 = arith.constant 0 : index
    %c0_21 = arith.constant 0 : index
    %23 = vector.load %arg13[%c0_20, %c0_21] : memref<1x64xf32, #tpu.memory_space<vmem>>, vector<1x64xf32>
    %24 = vector.broadcast %23 : vector<1x64xf32> to vector<48x64xf32>
    %25 = arith.addf %22, %24 : vector<48x64xf32>
    %cst_22 = arith.constant 0.000000e+00 : f32
    %26 = vector.broadcast %cst_22 : f32 to vector<48x64xf32>
    %27 = arith.maximumf %25, %26 : vector<48x64xf32>
    %c0_23 = arith.constant 0 : index
    %c0_24 = arith.constant 0 : index
    %28 = vector.load %arg14[%c0_23, %c0_24] : memref<64x64xf32, #tpu.memory_space<vmem>>, vector<64x64xf32>
    %cst_25 = arith.constant dense<0.000000e+00> : vector<48x64xf32>
    %29 = tpu.matmul %27, %28, %cst_25 {dimension_numbers = #tpu.dot_dimension_numbers<[1], [0], [0], [1], [0, 0, 1, 1], [], []>} : vector<48x64xf32>, vector<64x64xf32>, vector<48x64xf32> -> vector<48x64xf32>
    %c0_26 = arith.constant 0 : index
    %c0_27 = arith.constant 0 : index
    %30 = vector.load %arg15[%c0_26, %c0_27] : memref<1x64xf32, #tpu.memory_space<vmem>>, vector<1x64xf32>
    %31 = vector.broadcast %30 : vector<1x64xf32> to vector<48x64xf32>
    %32 = arith.addf %29, %31 : vector<48x64xf32>
    %33 = vector.extract_strided_slice %32 {offsets = [32, 0], sizes = [16, 64], strides = [1, 1]} : vector<48x64xf32> to vector<16x64xf32>
    %c0_28 = arith.constant 0 : index
    %c0_29 = arith.constant 0 : index
    %34 = vector.load %arg17[%c0_28, %c0_29] : memref<32x64xf32, #tpu.memory_space<vmem>>, vector<32x64xf32>
    %cst_30 = arith.constant dense<0.000000e+00> : vector<2x64xf32>
    %35 = tpu.matmul %19, %34, %cst_30 {dimension_numbers = #tpu.dot_dimension_numbers<[1], [0], [0], [1], [0, 0, 1, 1], [], []>} : vector<2x32xf32>, vector<32x64xf32>, vector<2x64xf32> -> vector<2x64xf32>
    %c0_31 = arith.constant 0 : index
    %c0_32 = arith.constant 0 : index
    %36 = vector.load %arg2[%c0_31, %c0_32] : memref<16x3xf32, #tpu.memory_space<vmem>>, vector<16x3xf32>
    %c0_33 = arith.constant 0 : index
    %c0_34 = arith.constant 0 : index
    %37 = vector.load %arg16[%c0_33, %c0_34] : memref<3x64xf32, #tpu.memory_space<vmem>>, vector<3x64xf32>
    %cst_35 = arith.constant dense<0.000000e+00> : vector<16x64xf32>
    %38 = tpu.matmul %36, %37, %cst_35 {dimension_numbers = #tpu.dot_dimension_numbers<[1], [0], [0], [1], [0, 0, 1, 1], [], []>} : vector<16x3xf32>, vector<3x64xf32>, vector<16x64xf32> -> vector<16x64xf32>
    %c0_36 = arith.constant 0 : index
    %c0_37 = arith.constant 0 : index
    %39 = vector.load %arg3[%c0_36, %c0_37] : memref<16x2xf32, #tpu.memory_space<vmem>>, vector<16x2xf32>
    %cst_38 = arith.constant dense<0.000000e+00> : vector<16x64xf32>
    %40 = tpu.matmul %39, %35, %cst_38 {dimension_numbers = #tpu.dot_dimension_numbers<[1], [0], [0], [1], [0, 0, 1, 1], [], []>} : vector<16x2xf32>, vector<2x64xf32>, vector<16x64xf32> -> vector<16x64xf32>
    %41 = arith.addf %38, %40 : vector<16x64xf32>
    %c0_39 = arith.constant 0 : index
    %c0_40 = arith.constant 0 : index
    %42 = vector.load %arg18[%c0_39, %c0_40] : memref<64x64xf32, #tpu.memory_space<vmem>>, vector<64x64xf32>
    %cst_41 = arith.constant dense<0.000000e+00> : vector<16x64xf32>
    %43 = tpu.matmul %33, %42, %cst_41 {dimension_numbers = #tpu.dot_dimension_numbers<[1], [0], [0], [1], [0, 0, 1, 1], [], []>} : vector<16x64xf32>, vector<64x64xf32>, vector<16x64xf32> -> vector<16x64xf32>
    %44 = arith.addf %41, %43 : vector<16x64xf32>
    %c0_42 = arith.constant 0 : index
    %c0_43 = arith.constant 0 : index
    %45 = vector.load %arg19[%c0_42, %c0_43] : memref<1x64xf32, #tpu.memory_space<vmem>>, vector<1x64xf32>
    %46 = vector.broadcast %45 : vector<1x64xf32> to vector<16x64xf32>
    %47 = arith.addf %44, %46 : vector<16x64xf32>
    %48 = tpu.concatenate %47, %47, %47 in 0 : vector<16x64xf32>, vector<16x64xf32>, vector<16x64xf32> -> vector<48x64xf32>
    %c0_44 = arith.constant 0 : index
    %c0_45 = arith.constant 0 : index
    %49 = vector.load %arg4[%c0_44, %c0_45] : memref<48x16xf32, #tpu.memory_space<vmem>>, vector<48x16xf32>
    %c0_46 = arith.constant 0 : index
    %c0_47 = arith.constant 0 : index
    %50 = vector.load %arg20[%c0_46, %c0_47] : memref<16x64xf32, #tpu.memory_space<vmem>>, vector<16x64xf32>
    %cst_48 = arith.constant dense<0.000000e+00> : vector<48x64xf32>
    %51 = tpu.matmul %49, %50, %cst_48 {dimension_numbers = #tpu.dot_dimension_numbers<[1], [0], [0], [1], [0, 0, 1, 1], [], []>} : vector<48x16xf32>, vector<16x64xf32>, vector<48x64xf32> -> vector<48x64xf32>
    %52 = arith.addf %48, %51 : vector<48x64xf32>
    %cst_49 = arith.constant 0.000000e+00 : f32
    %53 = vector.broadcast %cst_49 : f32 to vector<48x64xf32>
    %54 = arith.maximumf %52, %53 : vector<48x64xf32>
    %c0_50 = arith.constant 0 : index
    %c0_51 = arith.constant 0 : index
    %55 = vector.load %arg21[%c0_50, %c0_51] : memref<64x128xf32, #tpu.memory_space<vmem>>, vector<64x128xf32>
    %cst_52 = arith.constant dense<0.000000e+00> : vector<48x128xf32>
    %56 = tpu.matmul %54, %55, %cst_52 {dimension_numbers = #tpu.dot_dimension_numbers<[1], [0], [0], [1], [0, 0, 1, 1], [], []>} : vector<48x64xf32>, vector<64x128xf32>, vector<48x128xf32> -> vector<48x128xf32>
    %c0_53 = arith.constant 0 : index
    %c0_54 = arith.constant 0 : index
    %57 = vector.load %arg22[%c0_53, %c0_54] : memref<1x128xf32, #tpu.memory_space<vmem>>, vector<1x128xf32>
    %58 = vector.broadcast %57 : vector<1x128xf32> to vector<48x128xf32>
    %59 = arith.addf %56, %58 : vector<48x128xf32>
    %c0_55 = arith.constant 0 : index
    %c0_56 = arith.constant 0 : index
    %60 = vector.load %arg5[%c0_55, %c0_56] : memref<48x128xf32, #tpu.memory_space<vmem>>, vector<48x128xf32>
    %61 = arith.addf %59, %60 : vector<48x128xf32>
    %c0_57 = arith.constant 0 : index
    %c0_58 = arith.constant 0 : index
    %62 = vector.load %arg23[%c0_57, %c0_58] : memref<48x128xf32, #tpu.memory_space<vmem>>, vector<48x128xf32>
    tpu.vector_store %arg23[%c0_57, %c0_58], %61 {strides = array<i32>} : memref<48x128xf32, #tpu.memory_space<vmem>>, vector<48x128xf32>,
    return
  }
}

</mosaic_0001>

<llo_original>
// kernel: kpst_inference.1
$region0: #{kpst_inference.1}
  #allocation0 [shape = 'u32[]', space=smem, size = 0x4, offset = 0x4, fixed_abs, tag = 'smem constant byte address 0x4 - core index']
  #allocation1 [shape = 'u32[144,128]{1,0:T(1,128)}', space=vmem, size = 0x12000, scoped, tag = 'internal scratch']
  %s0 = inlined_call_operand.vmem [shape: f32[48,9], index: 0, kind: input, shape index: {}]
  %s1 = inlined_call_operand.vmem [shape: f32[2,512], index: 1, kind: input, shape index: {}]
  %s2 = inlined_call_operand.vmem [shape: f32[16,3], index: 2, kind: input, shape index: {}]
  %s3 = inlined_call_operand.vmem [shape: f32[16,2], index: 3, kind: input, shape index: {}]
  %s4 = inlined_call_operand.vmem [shape: f32[48,16], index: 4, kind: input, shape index: {}]
  %s5 = inlined_call_operand.vmem [shape: f32[48,128], index: 5, kind: input, shape index: {}]
  %s6 = inlined_call_operand.vmem [shape: bf16[512,128], index: 6, kind: input, shape index: {}]
  %s7 = inlined_call_operand.vmem [shape: f32[1,128], index: 7, kind: input, shape index: {}]
  %s8 = inlined_call_operand.vmem [shape: f32[128,32], index: 8, kind: input, shape index: {}]
  %s9 = inlined_call_operand.vmem [shape: f32[1,32], index: 9, kind: input, shape index: {}]
  %s10 = inlined_call_operand.vmem [shape: f32[1,32], index: 10, kind: input, shape index: {}]
  %s11 = inlined_call_operand.vmem [shape: f32[1,32], index: 11, kind: input, shape index: {}]
  %s12 = inlined_call_operand.vmem [shape: f32[9,64], index: 12, kind: input, shape index: {}]
  %s13 = inlined_call_operand.vmem [shape: f32[1,64], index: 13, kind: input, shape index: {}]
  %s14 = inlined_call_operand.vmem [shape: f32[64,64], index: 14, kind: input, shape index: {}]
  %s15 = inlined_call_operand.vmem [shape: f32[1,64], index: 15, kind: input, shape index: {}]
  %s16 = inlined_call_operand.vmem [shape: f32[3,64], index: 16, kind: input, shape index: {}]
  %s17 = inlined_call_operand.vmem [shape: f32[32,64], index: 17, kind: input, shape index: {}]
  %s18 = inlined_call_operand.vmem [shape: f32[64,64], index: 18, kind: input, shape index: {}]
  %s19 = inlined_call_operand.vmem [shape: f32[1,64], index: 19, kind: input, shape index: {}]
  %s20 = inlined_call_operand.vmem [shape: f32[16,64], index: 20, kind: input, shape index: {}]
  %s21 = inlined_call_operand.vmem [shape: f32[64,128], index: 21, kind: input, shape index: {}]
  %s22 = inlined_call_operand.vmem [shape: f32[1,128], index: 22, kind: input, shape index: {}]
  %s23 = inlined_call_operand.vmem [shape: f32[48,128], index: 23, kind: output, shape index: {}]
  %s24 = sld [smem:[#allocation0]]
  $region102: #{kpst_inference.1} parent=0
    _
  %s26 = ssub.s32 1, %s24
  %s27 = scalar_select 0, %s26, %s24
  // Predicated region
  $region2: #{kpst_inference.1} parent=0 // pred_check
    _
  $region3: #{kpst_inference.1} parent=0 // pred_check_branch
    %29 = sbr.rel (0) target = $region5
  $region4: #{kpst_inference.1} parent=0 // pred_region
    _
  $region5: #{kpst_inference.1} parent=0 // pred_fallthru
    _
  // Predicated region
  $region6: #{kpst_inference.1} parent=0 // pred_check
    _
  $region7: #{kpst_inference.1} parent=0 // pred_check_branch
    %31 = sbr.rel (0) target = $region9
  $region8: #{kpst_inference.1} parent=0 // pred_region
    _
  $region9: #{kpst_inference.1} parent=0 // pred_fallthru
    _
  // Predicated region
  $region10: #{kpst_inference.1} parent=0 // pred_check
    _
  $region11: #{kpst_inference.1} parent=0 // pred_check_branch
    %33 = sbr.rel (0) target = $region13
  $region12: #{kpst_inference.1} parent=0 // pred_region
    _
  $region13: #{kpst_inference.1} parent=0 // pred_fallthru
    _
  // Predicated region
  $region14: #{kpst_inference.1} parent=0 // pred_check
    _
  $region15: #{kpst_inference.1} parent=0 // pred_check_branch
    %35 = sbr.rel (0) target = $region17
  $region16: #{kpst_inference.1} parent=0 // pred_region
    _
  $region17: #{kpst_inference.1} parent=0 // pred_fallthru
    _
  // Predicated region
  $region18: #{kpst_inference.1} parent=0 // pred_check
    _
  $region19: #{kpst_inference.1} parent=0 // pred_check_branch
    %37 = sbr.rel (0) target = $region21
  $region20: #{kpst_inference.1} parent=0 // pred_region
    _
  $region21: #{kpst_inference.1} parent=0 // pred_fallthru
    _
  // Predicated region
  $region22: #{kpst_inference.1} parent=0 // pred_check
    _
  $region23: #{kpst_inference.1} parent=0 // pred_check_branch
    %39 = sbr.rel (0) target = $region25
  $region24: #{kpst_inference.1} parent=0 // pred_region
    _
  $region25: #{kpst_inference.1} parent=0 // pred_fallthru
    _
  // Predicated region
  $region26: #{kpst_inference.1} parent=0 // pred_check
    _
  $region27: #{kpst_inference.1} parent=0 // pred_check_branch
    %41 = sbr.rel (0) target = $region29
  $region28: #{kpst_inference.1} parent=0 // pred_region
    _
  $region29: #{kpst_inference.1} parent=0 // pred_fallthru
    _
  // Predicated region
  $region30: #{kpst_inference.1} parent=0 // pred_check
    _
  $region31: #{kpst_inference.1} parent=0 // pred_check_branch
    %43 = sbr.rel (0) target = $region33
  $region32: #{kpst_inference.1} parent=0 // pred_region
    _
  $region33: #{kpst_inference.1} parent=0 // pred_fallthru
    _
  // Predicated region
  $region34: #{kpst_inference.1} parent=0 // pred_check
    _
  $region35: #{kpst_inference.1} parent=0 // pred_check_branch
    %45 = sbr.rel (0) target = $region37
  $region36: #{kpst_inference.1} parent=0 // pred_region
    _
  $region37: #{kpst_inference.1} parent=0 // pred_fallthru
    _
  // Predicated region
  $region38: #{kpst_inference.1} parent=0 // pred_check
    _
  $region39: #{kpst_inference.1} parent=0 // pred_check_branch
    %47 = sbr.rel (0) target = $region41
  $region40: #{kpst_inference.1} parent=0 // pred_region
    _
  $region41: #{kpst_inference.1} parent=0 // pred_fallthru
    _
  // Predicated region
  $region42: #{kpst_inference.1} parent=0 // pred_check
    _
  $region43: #{kpst_inference.1} parent=0 // pred_check_branch
    %49 = sbr.rel (0) target = $region45
  $region44: #{kpst_inference.1} parent=0 // pred_region
    _
  $region45: #{kpst_inference.1} parent=0 // pred_fallthru
    _
  // Predicated region
  $region46: #{kpst_inference.1} parent=0 // pred_check
    _
  $region47: #{kpst_inference.1} parent=0 // pred_check_branch
    %51 = sbr.rel (0) target = $region49
  $region48: #{kpst_inference.1} parent=0 // pred_region
    _
  $region49: #{kpst_inference.1} parent=0 // pred_fallthru
    _
  // Predicated region
  $region50: #{kpst_inference.1} parent=0 // pred_check
    _
  $region51: #{kpst_inference.1} parent=0 // pred_check_branch
    %53 = sbr.rel (0) target = $region53
  $region52: #{kpst_inference.1} parent=0 // pred_region
    _
  $region53: #{kpst_inference.1} parent=0 // pred_fallthru
    _
  // Predicated region
  $region54: #{kpst_inference.1} parent=0 // pred_check
    _
  $region55: #{kpst_inference.1} parent=0 // pred_check_branch
    %55 = sbr.rel (0) target = $region57
  $region56: #{kpst_inference.1} parent=0 // pred_region
    _
  $region57: #{kpst_inference.1} parent=0 // pred_fallthru
    _
  // Predicated region
  $region58: #{kpst_inference.1} parent=0 // pred_check
    _
  $region59: #{kpst_inference.1} parent=0 // pred_check_branch
    %57 = sbr.rel (0) target = $region61
  $region60: #{kpst_inference.1} parent=0 // pred_region
    _
  $region61: #{kpst_inference.1} parent=0 // pred_fallthru
    _
  // Predicated region
  $region62: #{kpst_inference.1} parent=0 // pred_check
    _
  $region63: #{kpst_inference.1} parent=0 // pred_check_branch
    %59 = sbr.rel (0) target = $region65
  $region64: #{kpst_inference.1} parent=0 // pred_region
    _
  $region65: #{kpst_inference.1} parent=0 // pred_fallthru
    _
  // Predicated region
  $region66: #{kpst_inference.1} parent=0 // pred_check
    _
  $region67: #{kpst_inference.1} parent=0 // pred_check_branch
    %61 = sbr.rel (0) target = $region69
  $region68: #{kpst_inference.1} parent=0 // pred_region
    _
  $region69: #{kpst_inference.1} parent=0 // pred_fallthru
    _
  // Predicated region
  $region70: #{kpst_inference.1} parent=0 // pred_check
    _
  $region71: #{kpst_inference.1} parent=0 // pred_check_branch
    %63 = sbr.rel (0) target = $region73
  $region72: #{kpst_inference.1} parent=0 // pred_region
    _
  $region73: #{kpst_inference.1} parent=0 // pred_fallthru
    _
  // Predicated region
  $region74: #{kpst_inference.1} parent=0 // pred_check
    _
  $region75: #{kpst_inference.1} parent=0 // pred_check_branch
    %65 = sbr.rel (0) target = $region77
  $region76: #{kpst_inference.1} parent=0 // pred_region
    _
  $region77: #{kpst_inference.1} parent=0 // pred_fallthru
    _
  // Predicated region
  $region78: #{kpst_inference.1} parent=0 // pred_check
    _
  $region79: #{kpst_inference.1} parent=0 // pred_check_branch
    %67 = sbr.rel (0) target = $region81
  $region80: #{kpst_inference.1} parent=0 // pred_region
    _
  $region81: #{kpst_inference.1} parent=0 // pred_fallthru
    _
  // Predicated region
  $region82: #{kpst_inference.1} parent=0 // pred_check
    _
  $region83: #{kpst_inference.1} parent=0 // pred_check_branch
    %69 = sbr.rel (0) target = $region85
  $region84: #{kpst_inference.1} parent=0 // pred_region
    _
  $region85: #{kpst_inference.1} parent=0 // pred_fallthru
    _
  // Predicated region
  $region86: #{kpst_inference.1} parent=0 // pred_check
    _
  $region87: #{kpst_inference.1} parent=0 // pred_check_branch
    %71 = sbr.rel (0) target = $region89
  $region88: #{kpst_inference.1} parent=0 // pred_region
    _
  $region89: #{kpst_inference.1} parent=0 // pred_fallthru
    _
  // Predicated region
  $region90: #{kpst_inference.1} parent=0 // pred_check
    _
  $region91: #{kpst_inference.1} parent=0 // pred_check_branch
    %73 = sbr.rel (0) target = $region93
  $region92: #{kpst_inference.1} parent=0 // pred_region
    _
  $region93: #{kpst_inference.1} parent=0 // pred_fallthru
    _
  %v75 = vld [vmem:[%s1] sm:$0xff]
  %v77 = vcombine.high %v75, %v75
  %v79 = vunpack.c.l.s4 1983009808
  %v80 = vunpack.c.0.s8 %v79
  %v81 = vlaneseq
  %v82 = vshrl.u32 %v81, 7
  %v83 = vsub.s32 %v80, %v82
  %v84 = vrot.slane %v75, %v83
  %v86 = vunpack.c.l.s4 1983009808
  %v87 = vunpack.c.0.s8 %v86
  %v88 = vlaneseq
  %v89 = vshrl.u32 %v88, 7
  %v90 = vsub.s32 %v87, %v89
  %v91 = vrot.slane %v77, %v90
  %v92 = vcombine.high %v84, %v84
  %v93 = vcombine.high %v91, %v91
  %v98 = vpack.c.bf16 %v84, %v84
  %v99 = vpack.c.bf16 %v92, %v92
  %v100 = vpack.c.bf16 %v91, %v91
  %v101 = vpack.c.bf16 %v93, %v93
  %v102 = vld [vmem:[%s6] sm:$0xf]
  %v103 = vld [vmem:[%s6 + $0x4] sm:$0xf]
  %v104 = vld [vmem:[%s6 + $0x8] sm:$0xf]
  %v105 = vld [vmem:[%s6 + $0xc] sm:$0xf]
  %v106 = vld [vmem:[%s6 + $0x10] sm:$0xf]
  %v107 = vld [vmem:[%s6 + $0x14] sm:$0xf]
  %v108 = vld [vmem:[%s6 + $0x18] sm:$0xf]
  %v109 = vld [vmem:[%s6 + $0x1c] sm:$0xf]
  %v110 = vld [vmem:[%s6 + $0x20] sm:$0xf]
  %v111 = vld [vmem:[%s6 + $0x24] sm:$0xf]
  %v112 = vld [vmem:[%s6 + $0x28] sm:$0xf]
  %v113 = vld [vmem:[%s6 + $0x2c] sm:$0xf]
  %v114 = vld [vmem:[%s6 + $0x30] sm:$0xf]
  %v115 = vld [vmem:[%s6 + $0x34] sm:$0xf]
  %v116 = vld [vmem:[%s6 + $0x38] sm:$0xf]
  %v117 = vld [vmem:[%s6 + $0x3c] sm:$0xf]
  %v118 = vld [vmem:[%s6 + $0x40] sm:$0xf]
  %v119 = vld [vmem:[%s6 + $0x44] sm:$0xf]
  %v120 = vld [vmem:[%s6 + $0x48] sm:$0xf]
  %v121 = vld [vmem:[%s6 + $0x4c] sm:$0xf]
  %v122 = vld [vmem:[%s6 + $0x50] sm:$0xf]
  %v123 = vld [vmem:[%s6 + $0x54] sm:$0xf]
  %v124 = vld [vmem:[%s6 + $0x58] sm:$0xf]
  %v125 = vld [vmem:[%s6 + $0x5c] sm:$0xf]
  %v126 = vld [vmem:[%s6 + $0x60] sm:$0xf]
  %v127 = vld [vmem:[%s6 + $0x64] sm:$0xf]
  %v128 = vld [vmem:[%s6 + $0x68] sm:$0xf]
  %v129 = vld [vmem:[%s6 + $0x6c] sm:$0xf]
  %v130 = vld [vmem:[%s6 + $0x70] sm:$0xf]
  %v131 = vld [vmem:[%s6 + $0x74] sm:$0xf]
  %v132 = vld [vmem:[%s6 + $0x78] sm:$0xf]
  %v133 = vld [vmem:[%s6 + $0x7c] sm:$0xf]
  %v134 = vld [vmem:[%s6 + $0x80] sm:$0xf]
  %v135 = vld [vmem:[%s6 + $0x84] sm:$0xf]
  %v136 = vld [vmem:[%s6 + $0x88] sm:$0xf]
  %v137 = vld [vmem:[%s6 + $0x8c] sm:$0xf]
  %v138 = vld [vmem:[%s6 + $0x90] sm:$0xf]
  %v139 = vld [vmem:[%s6 + $0x94] sm:$0xf]
  %v140 = vld [vmem:[%s6 + $0x98] sm:$0xf]
  %v141 = vld [vmem:[%s6 + $0x9c] sm:$0xf]
  %v142 = vld [vmem:[%s6 + $0xa0] sm:$0xf]
  %v143 = vld [vmem:[%s6 + $0xa4] sm:$0xf]
  %v144 = vld [vmem:[%s6 + $0xa8] sm:$0xf]
  %v145 = vld [vmem:[%s6 + $0xac] sm:$0xf]
  %v146 = vld [vmem:[%s6 + $0xb0] sm:$0xf]
  %v147 = vld [vmem:[%s6 + $0xb4] sm:$0xf]
  %v148 = vld [vmem:[%s6 + $0xb8] sm:$0xf]
  %v149 = vld [vmem:[%s6 + $0xbc] sm:$0xf]
  %v150 = vld [vmem:[%s6 + $0xc0] sm:$0xf]
  %v151 = vld [vmem:[%s6 + $0xc4] sm:$0xf]
  %v152 = vld [vmem:[%s6 + $0xc8] sm:$0xf]
  %v153 = vld [vmem:[%s6 + $0xcc] sm:$0xf]
  %v154 = vld [vmem:[%s6 + $0xd0] sm:$0xf]
  %v155 = vld [vmem:[%s6 + $0xd4] sm:$0xf]
  %v156 = vld [vmem:[%s6 + $0xd8] sm:$0xf]
  %v157 = vld [vmem:[%s6 + $0xdc] sm:$0xf]
  %v158 = vld [vmem:[%s6 + $0xe0] sm:$0xf]
  %v159 = vld [vmem:[%s6 + $0xe4] sm:$0xf]
  %v160 = vld [vmem:[%s6 + $0xe8] sm:$0xf]
  %v161 = vld [vmem:[%s6 + $0xec] sm:$0xf]
  %v162 = vld [vmem:[%s6 + $0xf0] sm:$0xf]
  %v163 = vld [vmem:[%s6 + $0xf4] sm:$0xf]
  %v164 = vld [vmem:[%s6 + $0xf8] sm:$0xf]
  %v165 = vld [vmem:[%s6 + $0xfc] sm:$0xf]
  %v166 = vld [vmem:[%s7] sm:$0x1]
  %v168 = vlaneseq
  %v169 = vshrl.u32 %v168, 7
  %v170 = vsub.s32 0, %v169
  %v171 = vrot.slane %v166, %v170
  %v237 = vunpack.c.l.b16 %v102
  %v238 = vunpack.c.l.b16 %v103
  %v239 = vunpack.c.l.b16 %v104
  %v240 = vunpack.c.l.b16 %v105
  %v241 = vunpack.c.l.b16 %v106
  %v242 = vunpack.c.l.b16 %v107
  %v243 = vunpack.c.l.b16 %v108
  %v244 = vunpack.c.l.b16 %v109
  %v245 = vunpack.c.l.b16 %v110
  %v246 = vunpack.c.l.b16 %v111
  %v247 = vunpack.c.l.b16 %v112
  %v248 = vunpack.c.l.b16 %v113
  %v249 = vunpack.c.l.b16 %v114
  %v250 = vunpack.c.l.b16 %v115
  %v251 = vunpack.c.l.b16 %v116
  %v252 = vunpack.c.l.b16 %v117
  %v253 = vunpack.c.l.b16 %v118
  %v254 = vunpack.c.l.b16 %v119
  %v255 = vunpack.c.l.b16 %v120
  %v256 = vunpack.c.l.b16 %v121
  %v257 = vunpack.c.l.b16 %v122
  %v258 = vunpack.c.l.b16 %v123
  %v259 = vunpack.c.l.b16 %v124
  %v260 = vunpack.c.l.b16 %v125
  %v261 = vunpack.c.l.b16 %v126
  %v262 = vunpack.c.l.b16 %v127
  %v263 = vunpack.c.l.b16 %v128
  %v264 = vunpack.c.l.b16 %v129
  %v265 = vunpack.c.l.b16 %v130
  %v266 = vunpack.c.l.b16 %v131
  %v267 = vunpack.c.l.b16 %v132
  %v268 = vunpack.c.l.b16 %v133
  %v269 = vunpack.c.l.b16 %v134
  %v270 = vunpack.c.l.b16 %v135
  %v271 = vunpack.c.l.b16 %v136
  %v272 = vunpack.c.l.b16 %v137
  %v273 = vunpack.c.l.b16 %v138
  %v274 = vunpack.c.l.b16 %v139
  %v275 = vunpack.c.l.b16 %v140
  %v276 = vunpack.c.l.b16 %v141
  %v277 = vunpack.c.l.b16 %v142
  %v278 = vunpack.c.l.b16 %v143
  %v279 = vunpack.c.l.b16 %v144
  %v280 = vunpack.c.l.b16 %v145
  %v281 = vunpack.c.l.b16 %v146
  %v282 = vunpack.c.l.b16 %v147
  %v283 = vunpack.c.l.b16 %v148
  %v284 = vunpack.c.l.b16 %v149
  %v285 = vunpack.c.l.b16 %v150
  %v286 = vunpack.c.l.b16 %v151
  %v287 = vunpack.c.l.b16 %v152
  %v288 = vunpack.c.l.b16 %v153
  %v289 = vunpack.c.l.b16 %v154
  %v290 = vunpack.c.l.b16 %v155
  %v291 = vunpack.c.l.b16 %v156
  %v292 = vunpack.c.l.b16 %v157
  %v293 = vunpack.c.l.b16 %v158
  %v294 = vunpack.c.l.b16 %v159
  %v295 = vunpack.c.l.b16 %v160
  %v296 = vunpack.c.l.b16 %v161
  %v297 = vunpack.c.l.b16 %v162
  %v298 = vunpack.c.l.b16 %v163
  %v299 = vunpack.c.l.b16 %v164
  %v300 = vunpack.c.l.b16 %v165
  %v301 = vpack.c.b16 %v238, %v237
  %v302 = vpack.c.b16 %v240, %v239
  %v303 = vpack.c.b16 %v242, %v241
  %v304 = vpack.c.b16 %v244, %v243
  %v305 = vpack.c.b16 %v246, %v245
  %v306 = vpack.c.b16 %v248, %v247
  %v307 = vpack.c.b16 %v250, %v249
  %v308 = vpack.c.b16 %v252, %v251
  %v309 = vpack.c.b16 %v254, %v253
  %v310 = vpack.c.b16 %v256, %v255
  %v311 = vpack.c.b16 %v258, %v257
  %v312 = vpack.c.b16 %v260, %v259
  %v313 = vpack.c.b16 %v262, %v261
  %v314 = vpack.c.b16 %v264, %v263
  %v315 = vpack.c.b16 %v266, %v265
  %v316 = vpack.c.b16 %v268, %v267
  %v317 = vpack.c.b16 %v270, %v269
  %v318 = vpack.c.b16 %v272, %v271
  %v319 = vpack.c.b16 %v274, %v273
  %v320 = vpack.c.b16 %v276, %v275
  %v321 = vpack.c.b16 %v278, %v277
  %v322 = vpack.c.b16 %v280, %v279
  %v323 = vpack.c.b16 %v282, %v281
  %v324 = vpack.c.b16 %v284, %v283
  %v325 = vpack.c.b16 %v286, %v285
  %v326 = vpack.c.b16 %v288, %v287
  %v327 = vpack.c.b16 %v290, %v289
  %v328 = vpack.c.b16 %v292, %v291
  %v329 = vpack.c.b16 %v294, %v293
  %v330 = vpack.c.b16 %v296, %v295
  %v331 = vpack.c.b16 %v298, %v297
  %v332 = vpack.c.b16 %v300, %v299
  %365 = vmatprep.subr.bf16.mxu0 0
  %366 = vmatpush1.bf16.msra.mxu0 %v301
  %367 = vmatprep.subr.bf16.mxu0 0
  %368 = vmatpush1.bf16.msra.mxu0 %v302
  %369 = vmatprep.subr.bf16.mxu0 0
  %370 = vmatpush1.bf16.msra.mxu0 %v303
  %371 = vmatprep.subr.bf16.mxu0 0
  %372 = vmatpush1.bf16.msra.mxu0 %v304
  %373 = vmatprep.subr.bf16.mxu0 0
  %374 = vmatpush1.bf16.msra.mxu0 %v305
  %375 = vmatprep.subr.bf16.mxu0 0
  %376 = vmatpush1.bf16.msra.mxu0 %v306
  %377 = vmatprep.subr.bf16.mxu0 0
  %378 = vmatpush1.bf16.msra.mxu0 %v307
  %379 = vmatprep.subr.bf16.mxu0 0
  %380 = vmatpush1.bf16.msra.mxu0 %v308
  %381 = vmatprep.subr.bf16.mxu0 0
  %382 = vmatpush1.bf16.msra.mxu0 %v309
  %383 = vmatprep.subr.bf16.mxu0 0
  %384 = vmatpush1.bf16.msra.mxu0 %v310
  %385 = vmatprep.subr.bf16.mxu0 0
  %386 = vmatpush1.bf16.msra.mxu0 %v311
  %387 = vmatprep.subr.bf16.mxu0 0
  %388 = vmatpush1.bf16.msra.mxu0 %v312
  %389 = vmatprep.subr.bf16.mxu0 0
  %390 = vmatpush1.bf16.msra.mxu0 %v313
  %391 = vmatprep.subr.bf16.mxu0 0
  %392 = vmatpush1.bf16.msra.mxu0 %v314
  %393 = vmatprep.subr.bf16.mxu0 0
  %394 = vmatpush1.bf16.msra.mxu0 %v315
  %395 = vmatprep.subr.bf16.mxu0 0
  %396 = vmatpush1.bf16.msra.mxu0 %v316
  %397 = vmatprep.mubr.bf16.mxu0 %v99
  %398 = vmatmul.mubr.bf16.gmra.mrb[0].mxu0 %v98
  %v399 = vpop.f32.mrb[0].mxu0
  %v400 = vadd.f32 %v171, %v399
  %v401 = vpop.f32.mrb[0].mxu0
  %v402 = vpop.f32.mrb[0].mxu0
  %v403 = vpop.f32.mrb[0].mxu0
  %404 = vdwg.mxu0
  %405 = vmatprep.subr.bf16.mxu0 0
  %406 = vmatpush1.bf16.msra.mxu0 %v317
  %407 = vmatprep.subr.bf16.mxu0 0
  %408 = vmatpush1.bf16.msra.mxu0 %v318
  %409 = vmatprep.subr.bf16.mxu0 0
  %410 = vmatpush1.bf16.msra.mxu0 %v319
  %411 = vmatprep.subr.bf16.mxu0 0
  %412 = vmatpush1.bf16.msra.mxu0 %v320
  %413 = vmatprep.subr.bf16.mxu0 0
  %414 = vmatpush1.bf16.msra.mxu0 %v321
  %415 = vmatprep.subr.bf16.mxu0 0
  %416 = vmatpush1.bf16.msra.mxu0 %v322
  %417 = vmatprep.subr.bf16.mxu0 0
  %418 = vmatpush1.bf16.msra.mxu0 %v323
  %419 = vmatprep.subr.bf16.mxu0 0
  %420 = vmatpush1.bf16.msra.mxu0 %v324
  %421 = vmatprep.subr.bf16.mxu0 0
  %422 = vmatpush1.bf16.msra.mxu0 %v325
  %423 = vmatprep.subr.bf16.mxu0 0
  %424 = vmatpush1.bf16.msra.mxu0 %v326
  %425 = vmatprep.subr.bf16.mxu0 0
  %426 = vmatpush1.bf16.msra.mxu0 %v327
  %427 = vmatprep.subr.bf16.mxu0 0
  %428 = vmatpush1.bf16.msra.mxu0 %v328
  %429 = vmatprep.subr.bf16.mxu0 0
  %430 = vmatpush1.bf16.msra.mxu0 %v329
  %431 = vmatprep.subr.bf16.mxu0 0
  %432 = vmatpush1.bf16.msra.mxu0 %v330
  %433 = vmatprep.subr.bf16.mxu0 0
  %434 = vmatpush1.bf16.msra.mxu0 %v331
  %435 = vmatprep.subr.bf16.mxu0 0
  %436 = vmatpush1.bf16.msra.mxu0 %v332
  %437 = vmatprep.mubr.bf16.mxu0 %v101
  %438 = vmatmul.mubr.bf16.gmra.mrb[0].mxu0 %v100
  %v439 = vpop.f32.mrb[0].mxu0
  %v440 = vadd.f32 %v400, %v439
  %v441 = vpop.f32.mrb[0].mxu0
  %v442 = vpop.f32.mrb[0].mxu0
  %v443 = vpop.f32.mrb[0].mxu0
  %444 = vdwg.mxu0
  %v445 = vmax.f32 %v440, 0.0
  %v446 = vld [vmem:[%s8] sm:$0xff]
  %v447 = vld [vmem:[%s8 + $0x8] sm:$0xff]
  %v448 = vld [vmem:[%s8 + $0x10] sm:$0xff]
  %v449 = vld [vmem:[%s8 + $0x18] sm:$0xff]
  %v450 = vld [vmem:[%s8 + $0x20] sm:$0xff]
  %v451 = vld [vmem:[%s8 + $0x28] sm:$0xff]
  %v452 = vld [vmem:[%s8 + $0x30] sm:$0xff]
  %v453 = vld [vmem:[%s8 + $0x38] sm:$0xff]
  %v454 = vld [vmem:[%s8 + $0x40] sm:$0xff]
  %v455 = vld [vmem:[%s8 + $0x48] sm:$0xff]
  %v456 = vld [vmem:[%s8 + $0x50] sm:$0xff]
  %v457 = vld [vmem:[%s8 + $0x58] sm:$0xff]
  %v458 = vld [vmem:[%s8 + $0x60] sm:$0xff]
  %v459 = vld [vmem:[%s8 + $0x68] sm:$0xff]
  %v460 = vld [vmem:[%s8 + $0x70] sm:$0xff]
  %v461 = vld [vmem:[%s8 + $0x78] sm:$0xff]
  %v462 = vld [vmem:[%s9] sm:$0x1]
  %v464 = vlaneseq
  %v465 = vshrl.u32 %v464, 7
  %v466 = vsub.s32 0, %v465
  %v467 = vrot.slane %v462, %v466
  %469 = vmatprep.subr.mxu0 0.0
  %470 = vmatpush1.msra.mxu0 %v446
  %471 = vmatprep.subr.mxu0 0.0
  %472 = vmatpush1.msra.mxu0 %v447
  %473 = vmatprep.subr.mxu0 0.0
  %474 = vmatpush1.msra.mxu0 %v448
  %475 = vmatprep.subr.mxu0 0.0
  %476 = vmatpush1.msra.mxu0 %v449
  %477 = vmatprep.subr.mxu0 0.0
  %478 = vmatpush1.msra.mxu0 %v450
  %479 = vmatprep.subr.mxu0 0.0
  %480 = vmatpush1.msra.mxu0 %v451
  %481 = vmatprep.subr.mxu0 0.0
  %482 = vmatpush1.msra.mxu0 %v452
  %483 = vmatprep.subr.mxu0 0.0
  %484 = vmatpush1.msra.mxu0 %v453
  %485 = vmatprep.subr.mxu0 0.0
  %486 = vmatpush1.msra.mxu0 %v454
  %487 = vmatprep.subr.mxu0 0.0
  %488 = vmatpush1.msra.mxu0 %v455
  %489 = vmatprep.subr.mxu0 0.0
  %490 = vmatpush1.msra.mxu0 %v456
  %491 = vmatprep.subr.mxu0 0.0
  %492 = vmatpush1.msra.mxu0 %v457
  %493 = vmatprep.subr.mxu0 0.0
  %494 = vmatpush1.msra.mxu0 %v458
  %495 = vmatprep.subr.mxu0 0.0
  %496 = vmatpush1.msra.mxu0 %v459
  %497 = vmatprep.subr.mxu0 0.0
  %498 = vmatpush1.msra.mxu0 %v460
  %499 = vmatprep.subr.mxu0 0.0
  %500 = vmatpush1.msra.mxu0 %v461
  %501 = vmatprep.subr.mxu0 0.0
  %502 = vmatpush1.msra.mxu0 0.0
  %503 = vmatprep.subr.mxu0 0.0
  %504 = vmatpush1.msra.mxu0 0.0
  %505 = vmatprep.subr.mxu0 0.0
  %506 = vmatpush1.msra.mxu0 0.0
  %507 = vmatprep.subr.mxu0 0.0
  %508 = vmatpush1.msra.mxu0 0.0
  %509 = vmatprep.subr.mxu0 0.0
  %510 = vmatpush1.msra.mxu0 0.0
  %511 = vmatprep.subr.mxu0 0.0
  %512 = vmatpush1.msra.mxu0 0.0
  %513 = vmatprep.subr.mxu0 0.0
  %514 = vmatpush1.msra.mxu0 0.0
  %515 = vmatprep.subr.mxu0 0.0
  %516 = vmatpush1.msra.mxu0 0.0
  %517 = vmatprep.subr.mxu0 0.0
  %518 = vmatpush1.msra.mxu0 0.0
  %519 = vmatprep.subr.mxu0 0.0
  %520 = vmatpush1.msra.mxu0 0.0
  %521 = vmatprep.subr.mxu0 0.0
  %522 = vmatpush1.msra.mxu0 0.0
  %523 = vmatprep.subr.mxu0 0.0
  %524 = vmatpush1.msra.mxu0 0.0
  %525 = vmatprep.subr.mxu0 0.0
  %526 = vmatpush1.msra.mxu0 0.0
  %527 = vmatprep.subr.mxu0 0.0
  %528 = vmatpush1.msra.mxu0 0.0
  %529 = vmatprep.subr.mxu0 0.0
  %530 = vmatpush1.msra.mxu0 0.0
  %531 = vmatprep.subr.mxu0 0.0
  %532 = vmatpush1.msra.mxu0 0.0
  %533 = vmatprep.mubr.f32.mxu0 0.0
  %534 = vmatmul.mubr.f32.gmra.mrb[0].mxu0 %v445
  %v535 = vpop.f32.mrb[0].mxu0
  %v536 = vadd.f32 %v467, %v535
  %v537 = vpop.f32.mrb[0].mxu0
  %538 = vdwg.mxu0
  %v539 = vld [vmem:[%s10] sm:$0x1]
  %v541 = vlaneseq
  %v542 = vshrl.u32 %v541, 7
  %v543 = vsub.s32 0, %v542
  %v544 = vrot.slane %v539, %v543
  %v546 = vmul.f32 %v536, %v544
  %v547 = vld [vmem:[%s11] sm:$0x1]
  %v549 = vlaneseq
  %v550 = vshrl.u32 %v549, 7
  %v551 = vsub.s32 0, %v550
  %v552 = vrot.slane %v547, %v551
  %v554 = vadd.f32 %v546, %v552
  %v555 = vld [vmem:[%s0] sm:$0xff]
  %v556 = vld [vmem:[%s0 + $0x8] sm:$0xff]
  %v557 = vld [vmem:[%s0 + $0x10] sm:$0xff]
  %v558 = vld [vmem:[%s0 + $0x18] sm:$0xff]
  %v559 = vld [vmem:[%s0 + $0x20] sm:$0xff]
  %v560 = vld [vmem:[%s0 + $0x28] sm:$0xff]
  %v561 = vld [vmem:[%s12] sm:$0xff]
  %v562 = vld [vmem:[%s12 + $0x8] sm:$0x1]
  %v563 = vld [vmem:[%s13] sm:$0x1]
  %v565 = vlaneseq
  %v566 = vshrl.u32 %v565, 7
  %v567 = vsub.s32 0, %v566
  %v568 = vrot.slane %v563, %v567
  %vm570 = vcmask 72704
  %v572 = vsel %vm570, %v555, 0
  %v575 = vsel %vm570, %v556, 0
  %v578 = vsel %vm570, %v557, 0
  %v581 = vsel %vm570, %v558, 0
  %v584 = vsel %vm570, %v559, 0
  %v587 = vsel %vm570, %v560, 0
  %vm589 = vcmask 1040384
  %v591 = vsel %vm589, %v562, 0
  %593 = vmatprep.subr.mxu0 0.0
  %594 = vmatpush1.msra.mxu0 %v561
  %595 = vmatprep.subr.mxu0 0.0
  %596 = vmatpush1.msra.mxu0 %v591
  %597 = vmatprep.subr.mxu0 0.0
  %598 = vmatpush1.msra.mxu0 0.0
  %599 = vmatprep.subr.mxu0 0.0
  %600 = vmatpush1.msra.mxu0 0.0
  %601 = vmatprep.subr.mxu0 0.0
  %602 = vmatpush1.msra.mxu0 0.0
  %603 = vmatprep.subr.mxu0 0.0
  %604 = vmatpush1.msra.mxu0 0.0
  %605 = vmatprep.subr.mxu0 0.0
  %606 = vmatpush1.msra.mxu0 0.0
  %607 = vmatprep.subr.mxu0 0.0
  %608 = vmatpush1.msra.mxu0 0.0
  %609 = vmatprep.subr.mxu0 0.0
  %610 = vmatpush1.msra.mxu0 0.0
  %611 = vmatprep.subr.mxu0 0.0
  %612 = vmatpush1.msra.mxu0 0.0
  %613 = vmatprep.subr.mxu0 0.0
  %614 = vmatpush1.msra.mxu0 0.0
  %615 = vmatprep.subr.mxu0 0.0
  %616 = vmatpush1.msra.mxu0 0.0
  %617 = vmatprep.subr.mxu0 0.0
  %618 = vmatpush1.msra.mxu0 0.0
  %619 = vmatprep.subr.mxu0 0.0
  %620 = vmatpush1.msra.mxu0 0.0
  %621 = vmatprep.subr.mxu0 0.0
  %622 = vmatpush1.msra.mxu0 0.0
  %623 = vmatprep.subr.mxu0 0.0
  %624 = vmatpush1.msra.mxu0 0.0
  %625 = vmatprep.subr.mxu0 0.0
  %626 = vmatpush1.msra.mxu0 0.0
  %627 = vmatprep.subr.mxu0 0.0
  %628 = vmatpush1.msra.mxu0 0.0
  %629 = vmatprep.subr.mxu0 0.0
  %630 = vmatpush1.msra.mxu0 0.0
  %631 = vmatprep.subr.mxu0 0.0
  %632 = vmatpush1.msra.mxu0 0.0
  %633 = vmatprep.subr.mxu0 0.0
  %634 = vmatpush1.msra.mxu0 0.0
  %635 = vmatprep.subr.mxu0 0.0
  %636 = vmatpush1.msra.mxu0 0.0
  %637 = vmatprep.subr.mxu0 0.0
  %638 = vmatpush1.msra.mxu0 0.0
  %639 = vmatprep.subr.mxu0 0.0
  %640 = vmatpush1.msra.mxu0 0.0
  %641 = vmatprep.subr.mxu0 0.0
  %642 = vmatpush1.msra.mxu0 0.0
  %643 = vmatprep.subr.mxu0 0.0
  %644 = vmatpush1.msra.mxu0 0.0
  %645 = vmatprep.subr.mxu0 0.0
  %646 = vmatpush1.msra.mxu0 0.0
  %647 = vmatprep.subr.mxu0 0.0
  %648 = vmatpush1.msra.mxu0 0.0
  %649 = vmatprep.subr.mxu0 0.0
  %650 = vmatpush1.msra.mxu0 0.0
  %651 = vmatprep.subr.mxu0 0.0
  %652 = vmatpush1.msra.mxu0 0.0
  %653 = vmatprep.subr.mxu0 0.0
  %654 = vmatpush1.msra.mxu0 0.0
  %655 = vmatprep.subr.mxu0 0.0
  %656 = vmatpush1.msra.mxu0 0.0
  %657 = vmatprep.mubr.f32.mxu0 0.0
  %658 = vmatmul.mubr.f32.gmra.mrb[0].mxu0 %v572
  %v659 = vpop.f32.mrb[0].mxu0
  %v660 = vadd.f32 %v568, %v659
  %v661 = vpop.f32.mrb[0].mxu0
  %662 = vmatprep.mubr.f32.mxu0 0.0
  %663 = vmatmul.mubr.f32.gmra.mrb[0].mxu0 %v575
  %v664 = vpop.f32.mrb[0].mxu0
  %v665 = vadd.f32 %v568, %v664
  %v666 = vpop.f32.mrb[0].mxu0
  %667 = vmatprep.mubr.f32.mxu0 0.0
  %668 = vmatmul.mubr.f32.gmra.mrb[0].mxu0 %v578
  %v669 = vpop.f32.mrb[0].mxu0
  %v670 = vadd.f32 %v568, %v669
  %v671 = vpop.f32.mrb[0].mxu0
  %672 = vmatprep.mubr.f32.mxu0 0.0
  %673 = vmatmul.mubr.f32.gmra.mrb[0].mxu0 %v581
  %v674 = vpop.f32.mrb[0].mxu0
  %v675 = vadd.f32 %v568, %v674
  %v676 = vpop.f32.mrb[0].mxu0
  %677 = vmatprep.mubr.f32.mxu0 0.0
  %678 = vmatmul.mubr.f32.gmra.mrb[0].mxu0 %v584
  %v679 = vpop.f32.mrb[0].mxu0
  %v680 = vadd.f32 %v568, %v679
  %v681 = vpop.f32.mrb[0].mxu0
  %682 = vmatprep.mubr.f32.mxu0 0.0
  %683 = vmatmul.mubr.f32.gmra.mrb[0].mxu0 %v587
  %v684 = vpop.f32.mrb[0].mxu0
  %v685 = vadd.f32 %v568, %v684
  %v686 = vpop.f32.mrb[0].mxu0
  %687 = vdwg.mxu0
  %v688 = vmax.f32 %v660, 0.0
  %v689 = vmax.f32 %v665, 0.0
  %v690 = vmax.f32 %v670, 0.0
  %v691 = vmax.f32 %v675, 0.0
  %v692 = vmax.f32 %v680, 0.0
  %v693 = vmax.f32 %v685, 0.0
  %v694 = vld [vmem:[%s14] sm:$0xff]
  %v695 = vld [vmem:[%s14 + $0x8] sm:$0xff]
  %v696 = vld [vmem:[%s14 + $0x10] sm:$0xff]
  %v697 = vld [vmem:[%s14 + $0x18] sm:$0xff]
  %v698 = vld [vmem:[%s14 + $0x20] sm:$0xff]
  %v699 = vld [vmem:[%s14 + $0x28] sm:$0xff]
  %v700 = vld [vmem:[%s14 + $0x30] sm:$0xff]
  %v701 = vld [vmem:[%s14 + $0x38] sm:$0xff]
  %v702 = vld [vmem:[%s15] sm:$0x1]
  %v704 = vlaneseq
  %v705 = vshrl.u32 %v704, 7
  %v706 = vsub.s32 0, %v705
  %v707 = vrot.slane %v702, %v706
  %vm709 = vcmask 523264
  %v711 = vsel %vm709, %v688, 0
  %v714 = vsel %vm709, %v689, 0
  %v717 = vsel %vm709, %v690, 0
  %v720 = vsel %vm709, %v691, 0
  %v723 = vsel %vm709, %v692, 0
  %v726 = vsel %vm709, %v693, 0
  %728 = vmatprep.subr.mxu0 0.0
  %729 = vmatpush1.msra.mxu0 %v694
  %730 = vmatprep.subr.mxu0 0.0
  %731 = vmatpush1.msra.mxu0 %v695
  %732 = vmatprep.subr.mxu0 0.0
  %733 = vmatpush1.msra.mxu0 %v696
  %734 = vmatprep.subr.mxu0 0.0
  %735 = vmatpush1.msra.mxu0 %v697
  %736 = vmatprep.subr.mxu0 0.0
  %737 = vmatpush1.msra.mxu0 %v698
  %738 = vmatprep.subr.mxu0 0.0
  %739 = vmatpush1.msra.mxu0 %v699
  %740 = vmatprep.subr.mxu0 0.0
  %741 = vmatpush1.msra.mxu0 %v700
  %742 = vmatprep.subr.mxu0 0.0
  %743 = vmatpush1.msra.mxu0 %v701
  %744 = vmatprep.subr.mxu0 0.0
  %745 = vmatpush1.msra.mxu0 0.0
  %746 = vmatprep.subr.mxu0 0.0
  %747 = vmatpush1.msra.mxu0 0.0
  %748 = vmatprep.subr.mxu0 0.0
  %749 = vmatpush1.msra.mxu0 0.0
  %750 = vmatprep.subr.mxu0 0.0
  %751 = vmatpush1.msra.mxu0 0.0
  %752 = vmatprep.subr.mxu0 0.0
  %753 = vmatpush1.msra.mxu0 0.0
  %754 = vmatprep.subr.mxu0 0.0
  %755 = vmatpush1.msra.mxu0 0.0
  %756 = vmatprep.subr.mxu0 0.0
  %757 = vmatpush1.msra.mxu0 0.0
  %758 = vmatprep.subr.mxu0 0.0
  %759 = vmatpush1.msra.mxu0 0.0
  %760 = vmatprep.subr.mxu0 0.0
  %761 = vmatpush1.msra.mxu0 0.0
  %762 = vmatprep.subr.mxu0 0.0
  %763 = vmatpush1.msra.mxu0 0.0
  %764 = vmatprep.subr.mxu0 0.0
  %765 = vmatpush1.msra.mxu0 0.0
  %766 = vmatprep.subr.mxu0 0.0
  %767 = vmatpush1.msra.mxu0 0.0
  %768 = vmatprep.subr.mxu0 0.0
  %769 = vmatpush1.msra.mxu0 0.0
  %770 = vmatprep.subr.mxu0 0.0
  %771 = vmatpush1.msra.mxu0 0.0
  %772 = vmatprep.subr.mxu0 0.0
  %773 = vmatpush1.msra.mxu0 0.0
  %774 = vmatprep.subr.mxu0 0.0
  %775 = vmatpush1.msra.mxu0 0.0
  %776 = vmatprep.subr.mxu0 0.0
  %777 = vmatpush1.msra.mxu0 0.0
  %778 = vmatprep.subr.mxu0 0.0
  %779 = vmatpush1.msra.mxu0 0.0
  %780 = vmatprep.subr.mxu0 0.0
  %781 = vmatpush1.msra.mxu0 0.0
  %782 = vmatprep.subr.mxu0 0.0
  %783 = vmatpush1.msra.mxu0 0.0
  %784 = vmatprep.subr.mxu0 0.0
  %785 = vmatpush1.msra.mxu0 0.0
  %786 = vmatprep.subr.mxu0 0.0
  %787 = vmatpush1.msra.mxu0 0.0
  %788 = vmatprep.subr.mxu0 0.0
  %789 = vmatpush1.msra.mxu0 0.0
  %790 = vmatprep.subr.mxu0 0.0
  %791 = vmatpush1.msra.mxu0 0.0
  %792 = vmatprep.mubr.f32.mxu0 0.0
  %793 = vmatmul.mubr.f32.gmra.mrb[0].mxu0 %v711
  %v794 = vpop.f32.mrb[0].mxu0
  %v795 = vpop.f32.mrb[0].mxu0
  %796 = vmatprep.mubr.f32.mxu0 0.0
  %797 = vmatmul.mubr.f32.gmra.mrb[0].mxu0 %v714
  %v798 = vpop.f32.mrb[0].mxu0
  %v799 = vpop.f32.mrb[0].mxu0
  %800 = vmatprep.mubr.f32.mxu0 0.0
  %801 = vmatmul.mubr.f32.gmra.mrb[0].mxu0 %v717
  %v802 = vpop.f32.mrb[0].mxu0
  %v803 = vpop.f32.mrb[0].mxu0
  %804 = vmatprep.mubr.f32.mxu0 0.0
  %805 = vmatmul.mubr.f32.gmra.mrb[0].mxu0 %v720
  %v806 = vpop.f32.mrb[0].mxu0
  %v807 = vpop.f32.mrb[0].mxu0
  %808 = vmatprep.mubr.f32.mxu0 0.0
  %809 = vmatmul.mubr.f32.gmra.mrb[0].mxu0 %v723
  %v810 = vpop.f32.mrb[0].mxu0
  %v811 = vadd.f32 %v707, %v810
  %v812 = vpop.f32.mrb[0].mxu0
  %813 = vmatprep.mubr.f32.mxu0 0.0
  %814 = vmatmul.mubr.f32.gmra.mrb[0].mxu0 %v726
  %v815 = vpop.f32.mrb[0].mxu0
  %v816 = vadd.f32 %v707, %v815
  %v817 = vpop.f32.mrb[0].mxu0
  %818 = vdwg.mxu0
  %v819 = vld [vmem:[%s17] sm:$0xff]
  %v820 = vld [vmem:[%s17 + $0x8] sm:$0xff]
  %v821 = vld [vmem:[%s17 + $0x10] sm:$0xff]
  %v822 = vld [vmem:[%s17 + $0x18] sm:$0xff]
  %vm823 = vcmask 261120
  %v825 = vsel %vm823, %v554, 0
  %827 = vmatprep.subr.mxu0 0.0
  %828 = vmatpush1.msra.mxu0 %v819
  %829 = vmatprep.subr.mxu0 0.0
  %830 = vmatpush1.msra.mxu0 %v820
  %831 = vmatprep.subr.mxu0 0.0
  %832 = vmatpush1.msra.mxu0 %v821
  %833 = vmatprep.subr.mxu0 0.0
  %834 = vmatpush1.msra.mxu0 %v822
  %835 = vmatprep.subr.mxu0 0.0
  %836 = vmatpush1.msra.mxu0 0.0
  %837 = vmatprep.subr.mxu0 0.0
  %838 = vmatpush1.msra.mxu0 0.0
  %839 = vmatprep.subr.mxu0 0.0
  %840 = vmatpush1.msra.mxu0 0.0
  %841 = vmatprep.subr.mxu0 0.0
  %842 = vmatpush1.msra.mxu0 0.0
  %843 = vmatprep.subr.mxu0 0.0
  %844 = vmatpush1.msra.mxu0 0.0
  %845 = vmatprep.subr.mxu0 0.0
  %846 = vmatpush1.msra.mxu0 0.0
  %847 = vmatprep.subr.mxu0 0.0
  %848 = vmatpush1.msra.mxu0 0.0
  %849 = vmatprep.subr.mxu0 0.0
  %850 = vmatpush1.msra.mxu0 0.0
  %851 = vmatprep.subr.mxu0 0.0
  %852 = vmatpush1.msra.mxu0 0.0
  %853 = vmatprep.subr.mxu0 0.0
  %854 = vmatpush1.msra.mxu0 0.0
  %855 = vmatprep.subr.mxu0 0.0
  %856 = vmatpush1.msra.mxu0 0.0
  %857 = vmatprep.subr.mxu0 0.0
  %858 = vmatpush1.msra.mxu0 0.0
  %859 = vmatprep.subr.mxu0 0.0
  %860 = vmatpush1.msra.mxu0 0.0
  %861 = vmatprep.subr.mxu0 0.0
  %862 = vmatpush1.msra.mxu0 0.0
  %863 = vmatprep.subr.mxu0 0.0
  %864 = vmatpush1.msra.mxu0 0.0
  %865 = vmatprep.subr.mxu0 0.0
  %866 = vmatpush1.msra.mxu0 0.0
  %867 = vmatprep.subr.mxu0 0.0
  %868 = vmatpush1.msra.mxu0 0.0
  %869 = vmatprep.subr.mxu0 0.0
  %870 = vmatpush1.msra.mxu0 0.0
  %871 = vmatprep.subr.mxu0 0.0
  %872 = vmatpush1.msra.mxu0 0.0
  %873 = vmatprep.subr.mxu0 0.0
  %874 = vmatpush1.msra.mxu0 0.0
  %875 = vmatprep.subr.mxu0 0.0
  %876 = vmatpush1.msra.mxu0 0.0
  %877 = vmatprep.subr.mxu0 0.0
  %878 = vmatpush1.msra.mxu0 0.0
  %879 = vmatprep.subr.mxu0 0.0
  %880 = vmatpush1.msra.mxu0 0.0
  %881 = vmatprep.subr.mxu0 0.0
  %882 = vmatpush1.msra.mxu0 0.0
  %883 = vmatprep.subr.mxu0 0.0
  %884 = vmatpush1.msra.mxu0 0.0
  %885 = vmatprep.subr.mxu0 0.0
  %886 = vmatpush1.msra.mxu0 0.0
  %887 = vmatprep.subr.mxu0 0.0
  %888 = vmatpush1.msra.mxu0 0.0
  %889 = vmatprep.subr.mxu0 0.0
  %890 = vmatpush1.msra.mxu0 0.0
  %891 = vmatprep.mubr.f32.mxu0 0.0
  %892 = vmatmul.mubr.f32.gmra.mrb[0].mxu0 %v825
  %v893 = vpop.f32.mrb[0].mxu0
  %v894 = vadd.f32 0.0, %v893
  %v895 = vpop.f32.mrb[0].mxu0
  %896 = vdwg.mxu0
  %v897 = vld [vmem:[%s2] sm:$0xff]
  %v898 = vld [vmem:[%s2 + $0x8] sm:$0xff]
  %v899 = vld [vmem:[%s16] sm:$0x7]
  %v900 = vld [vmem:[%s3] sm:$0xff]
  %v901 = vld [vmem:[%s3 + $0x8] sm:$0xff]
  %vm902 = vcmask 15360
  %v904 = vsel %vm902, %v900, 0
  %v907 = vsel %vm902, %v901, 0
  %vm909 = vcmask 1041408
  %v911 = vsel %vm909, %v894, 0
  %913 = vmatprep.subr.mxu0 0.0
  %914 = vmatpush1.msra.mxu0 %v911
  %915 = vmatprep.subr.mxu0 0.0
  %916 = vmatpush1.msra.mxu0 0.0
  %917 = vmatprep.subr.mxu0 0.0
  %918 = vmatpush1.msra.mxu0 0.0
  %919 = vmatprep.subr.mxu0 0.0
  %920 = vmatpush1.msra.mxu0 0.0
  %921 = vmatprep.subr.mxu0 0.0
  %922 = vmatpush1.msra.mxu0 0.0
  %923 = vmatprep.subr.mxu0 0.0
  %924 = vmatpush1.msra.mxu0 0.0
  %925 = vmatprep.subr.mxu0 0.0
  %926 = vmatpush1.msra.mxu0 0.0
  %927 = vmatprep.subr.mxu0 0.0
  %928 = vmatpush1.msra.mxu0 0.0
  %929 = vmatprep.subr.mxu0 0.0
  %930 = vmatpush1.msra.mxu0 0.0
  %931 = vmatprep.subr.mxu0 0.0
  %932 = vmatpush1.msra.mxu0 0.0
  %933 = vmatprep.subr.mxu0 0.0
  %934 = vmatpush1.msra.mxu0 0.0
  %935 = vmatprep.subr.mxu0 0.0
  %936 = vmatpush1.msra.mxu0 0.0
  %937 = vmatprep.subr.mxu0 0.0
  %938 = vmatpush1.msra.mxu0 0.0
  %939 = vmatprep.subr.mxu0 0.0
  %940 = vmatpush1.msra.mxu0 0.0
  %941 = vmatprep.subr.mxu0 0.0
  %942 = vmatpush1.msra.mxu0 0.0
  %943 = vmatprep.subr.mxu0 0.0
  %944 = vmatpush1.msra.mxu0 0.0
  %945 = vmatprep.subr.mxu0 0.0
  %946 = vmatpush1.msra.mxu0 0.0
  %947 = vmatprep.subr.mxu0 0.0
  %948 = vmatpush1.msra.mxu0 0.0
  %949 = vmatprep.subr.mxu0 0.0
  %950 = vmatpush1.msra.mxu0 0.0
  %951 = vmatprep.subr.mxu0 0.0
  %952 = vmatpush1.msra.mxu0 0.0
  %953 = vmatprep.subr.mxu0 0.0
  %954 = vmatpush1.msra.mxu0 0.0
  %955 = vmatprep.subr.mxu0 0.0
  %956 = vmatpush1.msra.mxu0 0.0
  %957 = vmatprep.subr.mxu0 0.0
  %958 = vmatpush1.msra.mxu0 0.0
  %959 = vmatprep.subr.mxu0 0.0
  %960 = vmatpush1.msra.mxu0 0.0
  %961 = vmatprep.subr.mxu0 0.0
  %962 = vmatpush1.msra.mxu0 0.0
  %963 = vmatprep.subr.mxu0 0.0
  %964 = vmatpush1.msra.mxu0 0.0
  %965 = vmatprep.subr.mxu0 0.0
  %966 = vmatpush1.msra.mxu0 0.0
  %967 = vmatprep.subr.mxu0 0.0
  %968 = vmatpush1.msra.mxu0 0.0
  %969 = vmatprep.subr.mxu0 0.0
  %970 = vmatpush1.msra.mxu0 0.0
  %971 = vmatprep.subr.mxu0 0.0
  %972 = vmatpush1.msra.mxu0 0.0
  %973 = vmatprep.subr.mxu0 0.0
  %974 = vmatpush1.msra.mxu0 0.0
  %975 = vmatprep.subr.mxu0 0.0
  %976 = vmatpush1.msra.mxu0 0.0
  %977 = vmatprep.mubr.f32.mxu0 0.0
  %978 = vmatmul.mubr.f32.gmra.mrb[0].mxu0 %v904
  %v979 = vpop.f32.mrb[0].mxu0
  %v980 = vadd.f32 0.0, %v979
  %v981 = vpop.f32.mrb[0].mxu0
  %982 = vmatprep.mubr.f32.mxu0 0.0
  %983 = vmatmul.mubr.f32.gmra.mrb[0].mxu0 %v907
  %v984 = vpop.f32.mrb[0].mxu0
  %v985 = vadd.f32 0.0, %v984
  %v986 = vpop.f32.mrb[0].mxu0
  %987 = vdwg.mxu0
  %vm988 = vcmask 23552
  %v990 = vsel %vm988, %v897, 0
  %v993 = vsel %vm988, %v898, 0
  %vm995 = vcmask 1042432
  %v997 = vsel %vm995, %v899, 0
  %999 = vmatprep.subr.mxu0 0.0
  %1000 = vmatpush1.msra.mxu0 %v997
  %1001 = vmatprep.subr.mxu0 0.0
  %1002 = vmatpush1.msra.mxu0 0.0
  %1003 = vmatprep.subr.mxu0 0.0
  %1004 = vmatpush1.msra.mxu0 0.0
  %1005 = vmatprep.subr.mxu0 0.0
  %1006 = vmatpush1.msra.mxu0 0.0
  %1007 = vmatprep.subr.mxu0 0.0
  %1008 = vmatpush1.msra.mxu0 0.0
  %1009 = vmatprep.subr.mxu0 0.0
  %1010 = vmatpush1.msra.mxu0 0.0
  %1011 = vmatprep.subr.mxu0 0.0
  %1012 = vmatpush1.msra.mxu0 0.0
  %1013 = vmatprep.subr.mxu0 0.0
  %1014 = vmatpush1.msra.mxu0 0.0
  %1015 = vmatprep.subr.mxu0 0.0
  %1016 = vmatpush1.msra.mxu0 0.0
  %1017 = vmatprep.subr.mxu0 0.0
  %1018 = vmatpush1.msra.mxu0 0.0
  %1019 = vmatprep.subr.mxu0 0.0
  %1020 = vmatpush1.msra.mxu0 0.0
  %1021 = vmatprep.subr.mxu0 0.0
  %1022 = vmatpush1.msra.mxu0 0.0
  %1023 = vmatprep.subr.mxu0 0.0
  %1024 = vmatpush1.msra.mxu0 0.0
  %1025 = vmatprep.subr.mxu0 0.0
  %1026 = vmatpush1.msra.mxu0 0.0
  %1027 = vmatprep.subr.mxu0 0.0
  %1028 = vmatpush1.msra.mxu0 0.0
  %1029 = vmatprep.subr.mxu0 0.0
  %1030 = vmatpush1.msra.mxu0 0.0
  %1031 = vmatprep.subr.mxu0 0.0
  %1032 = vmatpush1.msra.mxu0 0.0
  %1033 = vmatprep.subr.mxu0 0.0
  %1034 = vmatpush1.msra.mxu0 0.0
  %1035 = vmatprep.subr.mxu0 0.0
  %1036 = vmatpush1.msra.mxu0 0.0
  %1037 = vmatprep.subr.mxu0 0.0
  %1038 = vmatpush1.msra.mxu0 0.0
  %1039 = vmatprep.subr.mxu0 0.0
  %1040 = vmatpush1.msra.mxu0 0.0
  %1041 = vmatprep.subr.mxu0 0.0
  %1042 = vmatpush1.msra.mxu0 0.0
  %1043 = vmatprep.subr.mxu0 0.0
  %1044 = vmatpush1.msra.mxu0 0.0
  %1045 = vmatprep.subr.mxu0 0.0
  %1046 = vmatpush1.msra.mxu0 0.0
  %1047 = vmatprep.subr.mxu0 0.0
  %1048 = vmatpush1.msra.mxu0 0.0
  %1049 = vmatprep.subr.mxu0 0.0
  %1050 = vmatpush1.msra.mxu0 0.0
  %1051 = vmatprep.subr.mxu0 0.0
  %1052 = vmatpush1.msra.mxu0 0.0
  %1053 = vmatprep.subr.mxu0 0.0
  %1054 = vmatpush1.msra.mxu0 0.0
  %1055 = vmatprep.subr.mxu0 0.0
  %1056 = vmatpush1.msra.mxu0 0.0
  %1057 = vmatprep.subr.mxu0 0.0
  %1058 = vmatpush1.msra.mxu0 0.0
  %1059 = vmatprep.subr.mxu0 0.0
  %1060 = vmatpush1.msra.mxu0 0.0
  %1061 = vmatprep.subr.mxu0 0.0
  %1062 = vmatpush1.msra.mxu0 0.0
  %1063 = vmatprep.mubr.f32.mxu0 0.0
  %1064 = vmatmul.mubr.f32.gmra.mrb[0].mxu0 %v990
  %v1065 = vpop.f32.mrb[0].mxu0
  %v1066 = vadd.f32 %v980, %v1065
  %v1067 = vpop.f32.mrb[0].mxu0
  %1068 = vmatprep.mubr.f32.mxu0 0.0
  %1069 = vmatmul.mubr.f32.gmra.mrb[0].mxu0 %v993
  %v1070 = vpop.f32.mrb[0].mxu0
  %v1071 = vadd.f32 %v985, %v1070
  %v1072 = vpop.f32.mrb[0].mxu0
  %1073 = vdwg.mxu0
  %v1074 = vld [vmem:[%s18] sm:$0xff]
  %v1075 = vld [vmem:[%s18 + $0x8] sm:$0xff]
  %v1076 = vld [vmem:[%s18 + $0x10] sm:$0xff]
  %v1077 = vld [vmem:[%s18 + $0x18] sm:$0xff]
  %v1078 = vld [vmem:[%s18 + $0x20] sm:$0xff]
  %v1079 = vld [vmem:[%s18 + $0x28] sm:$0xff]
  %v1080 = vld [vmem:[%s18 + $0x30] sm:$0xff]
  %v1081 = vld [vmem:[%s18 + $0x38] sm:$0xff]
  %v1083 = vsel %vm709, %v811, 0
  %v1086 = vsel %vm709, %v816, 0
  %1088 = vmatprep.subr.mxu0 0.0
  %1089 = vmatpush1.msra.mxu0 %v1074
  %1090 = vmatprep.subr.mxu0 0.0
  %1091 = vmatpush1.msra.mxu0 %v1075
  %1092 = vmatprep.subr.mxu0 0.0
  %1093 = vmatpush1.msra.mxu0 %v1076
  %1094 = vmatprep.subr.mxu0 0.0
  %1095 = vmatpush1.msra.mxu0 %v1077
  %1096 = vmatprep.subr.mxu0 0.0
  %1097 = vmatpush1.msra.mxu0 %v1078
  %1098 = vmatprep.subr.mxu0 0.0
  %1099 = vmatpush1.msra.mxu0 %v1079
  %1100 = vmatprep.subr.mxu0 0.0
  %1101 = vmatpush1.msra.mxu0 %v1080
  %1102 = vmatprep.subr.mxu0 0.0
  %1103 = vmatpush1.msra.mxu0 %v1081
  %1104 = vmatprep.subr.mxu0 0.0
  %1105 = vmatpush1.msra.mxu0 0.0
  %1106 = vmatprep.subr.mxu0 0.0
  %1107 = vmatpush1.msra.mxu0 0.0
  %1108 = vmatprep.subr.mxu0 0.0
  %1109 = vmatpush1.msra.mxu0 0.0
  %1110 = vmatprep.subr.mxu0 0.0
  %1111 = vmatpush1.msra.mxu0 0.0
  %1112 = vmatprep.subr.mxu0 0.0
  %1113 = vmatpush1.msra.mxu0 0.0
  %1114 = vmatprep.subr.mxu0 0.0
  %1115 = vmatpush1.msra.mxu0 0.0
  %1116 = vmatprep.subr.mxu0 0.0
  %1117 = vmatpush1.msra.mxu0 0.0
  %1118 = vmatprep.subr.mxu0 0.0
  %1119 = vmatpush1.msra.mxu0 0.0
  %1120 = vmatprep.subr.mxu0 0.0
  %1121 = vmatpush1.msra.mxu0 0.0
  %1122 = vmatprep.subr.mxu0 0.0
  %1123 = vmatpush1.msra.mxu0 0.0
  %1124 = vmatprep.subr.mxu0 0.0
  %1125 = vmatpush1.msra.mxu0 0.0
  %1126 = vmatprep.subr.mxu0 0.0
  %1127 = vmatpush1.msra.mxu0 0.0
  %1128 = vmatprep.subr.mxu0 0.0
  %1129 = vmatpush1.msra.mxu0 0.0
  %1130 = vmatprep.subr.mxu0 0.0
  %1131 = vmatpush1.msra.mxu0 0.0
  %1132 = vmatprep.subr.mxu0 0.0
  %1133 = vmatpush1.msra.mxu0 0.0
  %1134 = vmatprep.subr.mxu0 0.0
  %1135 = vmatpush1.msra.mxu0 0.0
  %1136 = vmatprep.subr.mxu0 0.0
  %1137 = vmatpush1.msra.mxu0 0.0
  %1138 = vmatprep.subr.mxu0 0.0
  %1139 = vmatpush1.msra.mxu0 0.0
  %1140 = vmatprep.subr.mxu0 0.0
  %1141 = vmatpush1.msra.mxu0 0.0
  %1142 = vmatprep.subr.mxu0 0.0
  %1143 = vmatpush1.msra.mxu0 0.0
  %1144 = vmatprep.subr.mxu0 0.0
  %1145 = vmatpush1.msra.mxu0 0.0
  %1146 = vmatprep.subr.mxu0 0.0
  %1147 = vmatpush1.msra.mxu0 0.0
  %1148 = vmatprep.subr.mxu0 0.0
  %1149 = vmatpush1.msra.mxu0 0.0
  %1150 = vmatprep.subr.mxu0 0.0
  %1151 = vmatpush1.msra.mxu0 0.0
  %1152 = vmatprep.mubr.f32.mxu0 0.0
  %1153 = vmatmul.mubr.f32.gmra.mrb[0].mxu0 %v1083
  %v1154 = vpop.f32.mrb[0].mxu0
  %v1155 = vadd.f32 0.0, %v1154
  %v1156 = vpop.f32.mrb[0].mxu0
  %1157 = vmatprep.mubr.f32.mxu0 0.0
  %1158 = vmatmul.mubr.f32.gmra.mrb[0].mxu0 %v1086
  %v1159 = vpop.f32.mrb[0].mxu0
  %v1160 = vadd.f32 0.0, %v1159
  %v1161 = vpop.f32.mrb[0].mxu0
  %1162 = vdwg.mxu0
  %v1163 = vadd.f32 %v1066, %v1155
  %v1164 = vadd.f32 %v1071, %v1160
  %v1165 = vld [vmem:[%s19] sm:$0x1]
  %v1167 = vlaneseq
  %v1168 = vshrl.u32 %v1167, 7
  %v1169 = vsub.s32 0, %v1168
  %v1170 = vrot.slane %v1165, %v1169
  %v1172 = vadd.f32 %v1163, %v1170
  %v1173 = vadd.f32 %v1164, %v1170
  %v1174 = vld [vmem:[%s4] sm:$0xff]
  %v1175 = vld [vmem:[%s4 + $0x8] sm:$0xff]
  %v1176 = vld [vmem:[%s4 + $0x10] sm:$0xff]
  %v1177 = vld [vmem:[%s4 + $0x18] sm:$0xff]
  %v1178 = vld [vmem:[%s4 + $0x20] sm:$0xff]
  %v1179 = vld [vmem:[%s4 + $0x28] sm:$0xff]
  %v1180 = vld [vmem:[%s20] sm:$0xff]
  %v1181 = vld [vmem:[%s20 + $0x8] sm:$0xff]
  %vm1182 = vcmask 130048
  %v1184 = vsel %vm1182, %v1174, 0
  %v1187 = vsel %vm1182, %v1175, 0
  %v1190 = vsel %vm1182, %v1176, 0
  %v1193 = vsel %vm1182, %v1177, 0
  %v1196 = vsel %vm1182, %v1178, 0
  %v1199 = vsel %vm1182, %v1179, 0
  %1201 = vmatprep.subr.mxu0 0.0
  %1202 = vmatpush1.msra.mxu0 %v1180
  %1203 = vmatprep.subr.mxu0 0.0
  %1204 = vmatpush1.msra.mxu0 %v1181
  %1205 = vmatprep.subr.mxu0 0.0
  %1206 = vmatpush1.msra.mxu0 0.0
  %1207 = vmatprep.subr.mxu0 0.0
  %1208 = vmatpush1.msra.mxu0 0.0
  %1209 = vmatprep.subr.mxu0 0.0
  %1210 = vmatpush1.msra.mxu0 0.0
  %1211 = vmatprep.subr.mxu0 0.0
  %1212 = vmatpush1.msra.mxu0 0.0
  %1213 = vmatprep.subr.mxu0 0.0
  %1214 = vmatpush1.msra.mxu0 0.0
  %1215 = vmatprep.subr.mxu0 0.0
  %1216 = vmatpush1.msra.mxu0 0.0
  %1217 = vmatprep.subr.mxu0 0.0
  %1218 = vmatpush1.msra.mxu0 0.0
  %1219 = vmatprep.subr.mxu0 0.0
  %1220 = vmatpush1.msra.mxu0 0.0
  %1221 = vmatprep.subr.mxu0 0.0
  %1222 = vmatpush1.msra.mxu0 0.0
  %1223 = vmatprep.subr.mxu0 0.0
  %1224 = vmatpush1.msra.mxu0 0.0
  %1225 = vmatprep.subr.mxu0 0.0
  %1226 = vmatpush1.msra.mxu0 0.0
  %1227 = vmatprep.subr.mxu0 0.0
  %1228 = vmatpush1.msra.mxu0 0.0
  %1229 = vmatprep.subr.mxu0 0.0
  %1230 = vmatpush1.msra.mxu0 0.0
  %1231 = vmatprep.subr.mxu0 0.0
  %1232 = vmatpush1.msra.mxu0 0.0
  %1233 = vmatprep.subr.mxu0 0.0
  %1234 = vmatpush1.msra.mxu0 0.0
  %1235 = vmatprep.subr.mxu0 0.0
  %1236 = vmatpush1.msra.mxu0 0.0
  %1237 = vmatprep.subr.mxu0 0.0
  %1238 = vmatpush1.msra.mxu0 0.0
  %1239 = vmatprep.subr.mxu0 0.0
  %1240 = vmatpush1.msra.mxu0 0.0
  %1241 = vmatprep.subr.mxu0 0.0
  %1242 = vmatpush1.msra.mxu0 0.0
  %1243 = vmatprep.subr.mxu0 0.0
  %1244 = vmatpush1.msra.mxu0 0.0
  %1245 = vmatprep.subr.mxu0 0.0
  %1246 = vmatpush1.msra.mxu0 0.0
  %1247 = vmatprep.subr.mxu0 0.0
  %1248 = vmatpush1.msra.mxu0 0.0
  %1249 = vmatprep.subr.mxu0 0.0
  %1250 = vmatpush1.msra.mxu0 0.0
  %1251 = vmatprep.subr.mxu0 0.0
  %1252 = vmatpush1.msra.mxu0 0.0
  %1253 = vmatprep.subr.mxu0 0.0
  %1254 = vmatpush1.msra.mxu0 0.0
  %1255 = vmatprep.subr.mxu0 0.0
  %1256 = vmatpush1.msra.mxu0 0.0
  %1257 = vmatprep.subr.mxu0 0.0
  %1258 = vmatpush1.msra.mxu0 0.0
  %1259 = vmatprep.subr.mxu0 0.0
  %1260 = vmatpush1.msra.mxu0 0.0
  %1261 = vmatprep.subr.mxu0 0.0
  %1262 = vmatpush1.msra.mxu0 0.0
  %1263 = vmatprep.subr.mxu0 0.0
  %1264 = vmatpush1.msra.mxu0 0.0
  %1265 = vmatprep.mubr.f32.mxu0 0.0
  %1266 = vmatmul.mubr.f32.gmra.mrb[0].mxu0 %v1184
  %v1267 = vpop.f32.mrb[0].mxu0
  %v1268 = vadd.f32 0.0, %v1267
  %v1269 = vpop.f32.mrb[0].mxu0
  %1270 = vmatprep.mubr.f32.mxu0 0.0
  %1271 = vmatmul.mubr.f32.gmra.mrb[0].mxu0 %v1187
  %v1272 = vpop.f32.mrb[0].mxu0
  %v1273 = vadd.f32 0.0, %v1272
  %v1274 = vpop.f32.mrb[0].mxu0
  %1275 = vmatprep.mubr.f32.mxu0 0.0
  %1276 = vmatmul.mubr.f32.gmra.mrb[0].mxu0 %v1190
  %v1277 = vpop.f32.mrb[0].mxu0
  %v1278 = vadd.f32 0.0, %v1277
  %v1279 = vpop.f32.mrb[0].mxu0
  %1280 = vmatprep.mubr.f32.mxu0 0.0
  %1281 = vmatmul.mubr.f32.gmra.mrb[0].mxu0 %v1193
  %v1282 = vpop.f32.mrb[0].mxu0
  %v1283 = vadd.f32 0.0, %v1282
  %v1284 = vpop.f32.mrb[0].mxu0
  %1285 = vmatprep.mubr.f32.mxu0 0.0
  %1286 = vmatmul.mubr.f32.gmra.mrb[0].mxu0 %v1196
  %v1287 = vpop.f32.mrb[0].mxu0
  %v1288 = vadd.f32 0.0, %v1287
  %v1289 = vpop.f32.mrb[0].mxu0
  %1290 = vmatprep.mubr.f32.mxu0 0.0
  %1291 = vmatmul.mubr.f32.gmra.mrb[0].mxu0 %v1199
  %v1292 = vpop.f32.mrb[0].mxu0
  %v1293 = vadd.f32 0.0, %v1292
  %v1294 = vpop.f32.mrb[0].mxu0
  %1295 = vdwg.mxu0
  %v1296 = vadd.f32 %v1172, %v1268
  %v1297 = vadd.f32 %v1173, %v1273
  %v1298 = vadd.f32 %v1172, %v1278
  %v1299 = vadd.f32 %v1173, %v1283
  %v1300 = vadd.f32 %v1172, %v1288
  %v1301 = vadd.f32 %v1173, %v1293
  %v1302 = vmax.f32 %v1296, 0.0
  %v1303 = vmax.f32 %v1297, 0.0
  %v1304 = vmax.f32 %v1298, 0.0
  %v1305 = vmax.f32 %v1299, 0.0
  %v1306 = vmax.f32 %v1300, 0.0
  %v1307 = vmax.f32 %v1301, 0.0
  %v1308 = vld [vmem:[%s21] sm:$0xff]
  %v1309 = vld [vmem:[%s21 + $0x8] sm:$0xff]
  %v1310 = vld [vmem:[%s21 + $0x10] sm:$0xff]
  %v1311 = vld [vmem:[%s21 + $0x18] sm:$0xff]
  %v1312 = vld [vmem:[%s21 + $0x20] sm:$0xff]
  %v1313 = vld [vmem:[%s21 + $0x28] sm:$0xff]
  %v1314 = vld [vmem:[%s21 + $0x30] sm:$0xff]
  %v1315 = vld [vmem:[%s21 + $0x38] sm:$0xff]
  %v1316 = vld [vmem:[%s22] sm:$0x1]
  %v1318 = vlaneseq
  %v1319 = vshrl.u32 %v1318, 7
  %v1320 = vsub.s32 0, %v1319
  %v1321 = vrot.slane %v1316, %v1320
  %v1324 = vsel %vm709, %v1302, 0
  %v1327 = vsel %vm709, %v1303, 0
  %v1330 = vsel %vm709, %v1304, 0
  %v1333 = vsel %vm709, %v1305, 0
  %v1336 = vsel %vm709, %v1306, 0
  %v1339 = vsel %vm709, %v1307, 0
  %1341 = vmatprep.subr.mxu0 0.0
  %1342 = vmatpush1.msra.mxu0 %v1308
  %1343 = vmatprep.subr.mxu0 0.0
  %1344 = vmatpush1.msra.mxu0 %v1309
  %1345 = vmatprep.subr.mxu0 0.0
  %1346 = vmatpush1.msra.mxu0 %v1310
  %1347 = vmatprep.subr.mxu0 0.0
  %1348 = vmatpush1.msra.mxu0 %v1311
  %1349 = vmatprep.subr.mxu0 0.0
  %1350 = vmatpush1.msra.mxu0 %v1312
  %1351 = vmatprep.subr.mxu0 0.0
  %1352 = vmatpush1.msra.mxu0 %v1313
  %1353 = vmatprep.subr.mxu0 0.0
  %1354 = vmatpush1.msra.mxu0 %v1314
  %1355 = vmatprep.subr.mxu0 0.0
  %1356 = vmatpush1.msra.mxu0 %v1315
  %1357 = vmatprep.subr.mxu0 0.0
  %1358 = vmatpush1.msra.mxu0 0.0
  %1359 = vmatprep.subr.mxu0 0.0
  %1360 = vmatpush1.msra.mxu0 0.0
  %1361 = vmatprep.subr.mxu0 0.0
  %1362 = vmatpush1.msra.mxu0 0.0
  %1363 = vmatprep.subr.mxu0 0.0
  %1364 = vmatpush1.msra.mxu0 0.0
  %1365 = vmatprep.subr.mxu0 0.0
  %1366 = vmatpush1.msra.mxu0 0.0
  %1367 = vmatprep.subr.mxu0 0.0
  %1368 = vmatpush1.msra.mxu0 0.0
  %1369 = vmatprep.subr.mxu0 0.0
  %1370 = vmatpush1.msra.mxu0 0.0
  %1371 = vmatprep.subr.mxu0 0.0
  %1372 = vmatpush1.msra.mxu0 0.0
  %1373 = vmatprep.subr.mxu0 0.0
  %1374 = vmatpush1.msra.mxu0 0.0
  %1375 = vmatprep.subr.mxu0 0.0
  %1376 = vmatpush1.msra.mxu0 0.0
  %1377 = vmatprep.subr.mxu0 0.0
  %1378 = vmatpush1.msra.mxu0 0.0
  %1379 = vmatprep.subr.mxu0 0.0
  %1380 = vmatpush1.msra.mxu0 0.0
  %1381 = vmatprep.subr.mxu0 0.0
  %1382 = vmatpush1.msra.mxu0 0.0
  %1383 = vmatprep.subr.mxu0 0.0
  %1384 = vmatpush1.msra.mxu0 0.0
  %1385 = vmatprep.subr.mxu0 0.0
  %1386 = vmatpush1.msra.mxu0 0.0
  %1387 = vmatprep.subr.mxu0 0.0
  %1388 = vmatpush1.msra.mxu0 0.0
  %1389 = vmatprep.subr.mxu0 0.0
  %1390 = vmatpush1.msra.mxu0 0.0
  %1391 = vmatprep.subr.mxu0 0.0
  %1392 = vmatpush1.msra.mxu0 0.0
  %1393 = vmatprep.subr.mxu0 0.0
  %1394 = vmatpush1.msra.mxu0 0.0
  %1395 = vmatprep.subr.mxu0 0.0
  %1396 = vmatpush1.msra.mxu0 0.0
  %1397 = vmatprep.subr.mxu0 0.0
  %1398 = vmatpush1.msra.mxu0 0.0
  %1399 = vmatprep.subr.mxu0 0.0
  %1400 = vmatpush1.msra.mxu0 0.0
  %1401 = vmatprep.subr.mxu0 0.0
  %1402 = vmatpush1.msra.mxu0 0.0
  %1403 = vmatprep.subr.mxu0 0.0
  %1404 = vmatpush1.msra.mxu0 0.0
  %1405 = vmatprep.mubr.f32.mxu0 0.0
  %1406 = vmatmul.mubr.f32.gmra.mrb[0].mxu0 %v1324
  %v1407 = vpop.f32.mrb[0].mxu0
  %v1408 = vadd.f32 %v1321, %v1407
  %v1409 = vpop.f32.mrb[0].mxu0
  %1410 = vmatprep.mubr.f32.mxu0 0.0
  %1411 = vmatmul.mubr.f32.gmra.mrb[0].mxu0 %v1327
  %v1412 = vpop.f32.mrb[0].mxu0
  %v1413 = vadd.f32 %v1321, %v1412
  %v1414 = vpop.f32.mrb[0].mxu0
  %1415 = vmatprep.mubr.f32.mxu0 0.0
  %1416 = vmatmul.mubr.f32.gmra.mrb[0].mxu0 %v1330
  %v1417 = vpop.f32.mrb[0].mxu0
  %v1418 = vadd.f32 %v1321, %v1417
  %v1419 = vpop.f32.mrb[0].mxu0
  %1420 = vmatprep.mubr.f32.mxu0 0.0
  %1421 = vmatmul.mubr.f32.gmra.mrb[0].mxu0 %v1333
  %v1422 = vpop.f32.mrb[0].mxu0
  %v1423 = vadd.f32 %v1321, %v1422
  %v1424 = vpop.f32.mrb[0].mxu0
  %1425 = vmatprep.mubr.f32.mxu0 0.0
  %1426 = vmatmul.mubr.f32.gmra.mrb[0].mxu0 %v1336
  %v1427 = vpop.f32.mrb[0].mxu0
  %v1428 = vadd.f32 %v1321, %v1427
  %v1429 = vpop.f32.mrb[0].mxu0
  %1430 = vmatprep.mubr.f32.mxu0 0.0
  %1431 = vmatmul.mubr.f32.gmra.mrb[0].mxu0 %v1339
  %v1432 = vpop.f32.mrb[0].mxu0
  %v1433 = vadd.f32 %v1321, %v1432
  %v1434 = vpop.f32.mrb[0].mxu0
  %1435 = vdwg.mxu0
  %v1436 = vld [vmem:[%s5] sm:$0xff]
  %v1437 = vld [vmem:[%s5 + $0x8] sm:$0xff]
  %v1438 = vld [vmem:[%s5 + $0x10] sm:$0xff]
  %v1439 = vld [vmem:[%s5 + $0x18] sm:$0xff]
  %v1440 = vld [vmem:[%s5 + $0x20] sm:$0xff]
  %v1441 = vld [vmem:[%s5 + $0x28] sm:$0xff]
  %v1442 = vadd.f32 %v1408, %v1436
  %v1443 = vadd.f32 %v1413, %v1437
  %v1444 = vadd.f32 %v1418, %v1438
  %v1445 = vadd.f32 %v1423, %v1439
  %v1446 = vadd.f32 %v1428, %v1440
  %v1447 = vadd.f32 %v1433, %v1441
  %1448 = vst [vmem:[%s23] sm:$0xff] %v1442
  %1449 = vst [vmem:[%s23 + $0x8] sm:$0xff] %v1443
  %1450 = vst [vmem:[%s23 + $0x10] sm:$0xff] %v1444
  %1451 = vst [vmem:[%s23 + $0x18] sm:$0xff] %v1445
  %1452 = vst [vmem:[%s23 + $0x20] sm:$0xff] %v1446
  %1453 = vst [vmem:[%s23 + $0x28] sm:$0xff] %v1447
  // Predicated region
  $region94: #{kpst_inference.1} parent=0 // pred_check
    _
  $region95: #{kpst_inference.1} parent=0 // pred_check_branch
    %1455 = sbr.rel (0) target = $region97
  $region96: #{kpst_inference.1} parent=0 // pred_region
    _
  $region97: #{kpst_inference.1} parent=0 // pred_fallthru
    _
  // Predicated region
  $region98: #{kpst_inference.1} parent=0 // pred_check
    _
  $region99: #{kpst_inference.1} parent=0 // pred_check_branch
    %1457 = sbr.rel (0) target = $region101
  $region100: #{kpst_inference.1} parent=0 // pred_region
    _
  $region101: #{kpst_inference.1} parent=0 // pred_fallthru
    _

</llo_original>
